<compile_context>
chip_gen: v7x
topology: tpu7x:2x2x1
jax: 0.10.0
libtpu: 0.0.40
codegen_flags: <defaults>
</compile_context>

<pallas_src>
import functools

import jax
import jax.numpy as jnp
from jax import lax
from jax.experimental import pallas as pl
from jax.experimental.pallas import tpu as pltpu


def _smooth_l1(x, y):
    # F.smooth_l1_loss with beta=1.0, per-element (no reduction)
    diff = jnp.abs(x - y)
    return jnp.where(diff < 1.0, 0.5 * diff * diff, diff - 0.5)


def _geometry_loss_kernel(s_ref, t_ref, loss_ref, *, w_d, w_a):
    B = s_ref.shape[0]
    B2 = 2 * B

    # --- One fused gram for student + teacher -------------------------------
    # (2B, D) operand -> single MXU contraction; G_s / G_t are the diagonal
    # blocks of the (2B, 2B) result.  The off-diagonal cross block is a free
    # corner of the MXU tile.  Native input dtype goes straight to the MXU.
    e = jnp.concatenate([s_ref[...], t_ref[...]], axis=0)            # (2B, D)
    Gf = lax.dot_general(e, e, (((1,), (1,)), ((), ())),
                         preferred_element_type=jnp.float32)         # (2B, 2B)

    row2 = lax.broadcasted_iota(jnp.int32, (B2, B2), 0)
    col2 = lax.broadcasted_iota(jnp.int32, (B2, B2), 1)
    eye2 = row2 == col2

    # Squared norms from the gram diagonal (already resident; keeps d2 exactly
    # symmetric, which the gram-identity angle computation relies on).  One
    # lane-axis reduce for the column form, one (cheap) sublane-axis reduce
    # for the row form; kept as reduces rather than a transpose for lowering
    # robustness on the tiny (2B, 2B) tile.
    diag_m = jnp.where(eye2, Gf, 0.0)
    sq_col = jnp.sum(diag_m, axis=1, keepdims=True)                  # (2B, 1)
    sq_row = jnp.sum(diag_m, axis=0, keepdims=True)                  # (1, 2B)

    d2 = jnp.maximum(sq_col + sq_row - 2.0 * Gf, 1e-12)
    d_raw = jnp.sqrt(d2)                       # >= 1e-6 everywhere (clamp above)
    # pdist (diag zeroed) + hoisted reciprocal for the angle normalization.
    # inv_d's zero diagonal also serves as the j==i / k==i mask below.
    d = jnp.where(eye2, 0.0, d_raw)
    inv_d = jnp.where(eye2, 0.0, 1.0 / d_raw)

    # Per-tensor diagonal blocks of the fused matrices (static slices).
    G_s, G_t = Gf[:B, :B], Gf[B:, B:]
    d_s, d_t = d[:B, :B], d[B:, B:]
    inv_s, inv_t = inv_d[:B, :B], inv_d[B:, B:]

    # Mean over positive distances: with the 1e-12 clamp every off-diagonal
    # entry is strictly positive, so the positive count is exactly B*(B-1).
    npos = float(B * (B - 1))
    dn_s = d_s * (npos / jnp.sum(d_s))
    dn_t = d_t * (npos / jnp.sum(d_t))

    # --- RKD angle term via the gram identity --------------------------------
    # angle[i,j,k] = (G[j,k] - G[i,j] - G[i,k] + G[i,i]) / (d[i,j] * d[i,k]),
    # entries with j==i or k==i forced to 0 by inv_d's zeroed diagonal.
    # i is a Python constant in the unrolled loop -> static slices only.
    def angle_slice(G, inv, i):
        gi_k = G[i:i + 1, :]               # (1, B)  = G[i, k]
        gi_j = G[:, i:i + 1]               # (B, 1)  = G[j, i] (G symmetric)
        gii = gi_k[:, i:i + 1]             # (1, 1)  = G[i, i] (reuse the row)
        inner = G - gi_j - gi_k + gii
        return inner * (inv[:, i:i + 1] * inv[i:i + 1, :])

    ang = jnp.zeros((B, B), dtype=jnp.float32)
    for i in range(B):                     # static 8-iteration unroll
        ang = ang + _smooth_l1(angle_slice(G_s, inv_s, i),
                               angle_slice(G_t, inv_t, i))

    # --- Combine both losses: one accumulator, one reduce, one SMEM write ----
    acc = (w_d / (B * B)) * _smooth_l1(dn_s, dn_t) + (w_a / (B ** 3)) * ang
    loss_ref[0] = jnp.sum(acc)


def geometry_loss(f_s, f_t, w_d=2.0, w_a=3.0):
    """Pallas implementation of Geometry_loss.forward (returns a scalar)."""
    # No dtype cast in the wrapper: activations are DMA'd in their native
    # dtype (bf16 feeds the MXU directly with f32 accumulation in-kernel).
    s = f_s.reshape(f_s.shape[0], -1)
    t = f_t.reshape(f_t.shape[0], -1)
    out = pl.pallas_call(
        functools.partial(_geometry_loss_kernel, w_d=float(w_d), w_a=float(w_a)),
        out_shape=jax.ShapeDtypeStruct((1,), jnp.float32),
        in_specs=[pl.BlockSpec(memory_space=pltpu.MemorySpace.VMEM),
                  pl.BlockSpec(memory_space=pltpu.MemorySpace.VMEM)],
        out_specs=pl.BlockSpec(memory_space=pltpu.MemorySpace.SMEM),
    )(s, t)
    return out[0]


def geometry_loss_ref(f_s, f_t, w_d=2.0, w_a=3.0):
    """Pure-JAX reference mirroring the PyTorch module (for validation only)."""
    s = f_s.reshape(f_s.shape[0], -1).astype(jnp.float32)
    t = f_t.reshape(f_t.shape[0], -1).astype(jnp.float32)

    def pdist(e):
        sq = jnp.sum(e * e, axis=1)
        res = jnp.maximum(sq[:, None] + sq[None, :] - 2.0 * (e @ e.T), 1e-12)
        res = jnp.sqrt(res)
        res = res * (1.0 - jnp.eye(e.shape[0], dtype=res.dtype))
        return res

    def norm_by_pos_mean(d):
        pos = d > 0
        return d / (jnp.sum(jnp.where(pos, d, 0.0)) / jnp.sum(pos.astype(jnp.float32)))

    def smooth_l1(x, y):
        diff = jnp.abs(x - y)
        return jnp.mean(jnp.where(diff < 1.0, 0.5 * diff * diff, diff - 0.5))

    def angles(e):
        diff = e[None, :, :] - e[:, None, :]
        nrm = jnp.maximum(jnp.sqrt(jnp.sum(diff * diff, axis=2, keepdims=True)), 1e-12)
        nd = diff / nrm
        return jnp.einsum('ijd,ikd->ijk', nd, nd)

    loss_d = smooth_l1(norm_by_pos_mean(pdist(s)), norm_by_pos_mean(pdist(t)))
    loss_a = smooth_l1(angles(s), angles(t))
    return w_d * loss_d + w_a * loss_a


if __name__ == "__main__":
    key = jax.random.PRNGKey(0)
    k1, k2 = jax.random.split(key)
    # f_s / f_t mirror PyTorch NCHW activations: (batch=8, channels=4, 16, 16)
    f_s = jax.random.normal(k1, (8, 4, 16, 16), dtype=jnp.float32)
    f_t = jax.random.normal(k2, (8, 4, 16, 16), dtype=jnp.float32)

    loss = jax.block_until_ready(geometry_loss(f_s, f_t))
    ref = jax.block_until_ready(geometry_loss_ref(f_s, f_t))

    assert jnp.isfinite(loss), loss
    assert abs(float(loss) - float(ref)) < 1e-4, (float(loss), float(ref))
    print("KERNEL_OK")
</pallas_src>

<mosaic_0001>
module attributes {stable_mosaic.version = 11 : i64} {
  func.func @_geometry_loss_kernel(%arg0: memref<8x1024xf32, #tpu.memory_space<vmem>>, %arg1: memref<8x1024xf32, #tpu.memory_space<vmem>>, %arg2: memref<1xf32, #tpu.memory_space<smem>>) attributes {dimension_semantics = [], scalar_prefetch = 0 : i64, scratch_operands = 0 : i64, tpu.core_type = #tpu.core_type<tc>} {
    %c0 = arith.constant 0 : index
    %c0_0 = arith.constant 0 : index
    %0 = vector.load %arg0[%c0, %c0_0] : memref<8x1024xf32, #tpu.memory_space<vmem>>, vector<8x1024xf32>
    %c0_1 = arith.constant 0 : index
    %c0_2 = arith.constant 0 : index
    %1 = vector.load %arg1[%c0_1, %c0_2] : memref<8x1024xf32, #tpu.memory_space<vmem>>, vector<8x1024xf32>
    %2 = tpu.concatenate %0, %1 in 0 : vector<8x1024xf32>, vector<8x1024xf32> -> vector<16x1024xf32>
    %cst = arith.constant dense<0.000000e+00> : vector<16x16xf32>
    %3 = tpu.matmul %2, %2, %cst {dimension_numbers = #tpu.dot_dimension_numbers<[1], [1], [0], [0], [0, 0, 1, 0], [], []>} : vector<16x1024xf32>, vector<16x1024xf32>, vector<16x16xf32> -> vector<16x16xf32>
    %4 = tpu.iota {dimensions = array<i32: 0>} : vector<16x16xi32>
    %5 = tpu.iota {dimensions = array<i32: 1>} : vector<16x16xi32>
    %6 = arith.cmpi eq, %4, %5 : vector<16x16xi32>
    %cst_3 = arith.constant 0.000000e+00 : f32
    %7 = vector.broadcast %cst_3 : f32 to vector<16x16xf32>
    %8 = arith.select %6, %3, %7 : vector<16x16xi1>, vector<16x16xf32>
    %cst_4 = arith.constant dense<0.000000e+00> : vector<16xf32>
    %9 = vector.multi_reduction <add>, %8, %cst_4 [1] : vector<16x16xf32> to vector<16xf32>
    %10 = vector.shape_cast %9 : vector<16xf32> to vector<16x1xf32>
    %cst_5 = arith.constant dense<0.000000e+00> : vector<16xf32>
    %11 = vector.multi_reduction <add>, %8, %cst_5 [0] : vector<16x16xf32> to vector<16xf32>
    %12 = vector.shape_cast %11 : vector<16xf32> to vector<1x16xf32>
    %13 = vector.broadcast %10 : vector<16x1xf32> to vector<16x16xf32>
    %14 = vector.broadcast %12 : vector<1x16xf32> to vector<16x16xf32>
    %15 = arith.addf %13, %14 : vector<16x16xf32>
    %cst_6 = arith.constant 2.000000e+00 : f32
    %16 = vector.broadcast %cst_6 : f32 to vector<16x16xf32>
    %17 = arith.mulf %16, %3 : vector<16x16xf32>
    %18 = arith.subf %15, %17 : vector<16x16xf32>
    %cst_7 = arith.constant 9.99999996E-13 : f32
    %19 = vector.broadcast %cst_7 : f32 to vector<16x16xf32>
    %20 = arith.maximumf %18, %19 : vector<16x16xf32>
    %21 = math.sqrt %20 : vector<16x16xf32>
    %cst_8 = arith.constant 0.000000e+00 : f32
    %22 = vector.broadcast %cst_8 : f32 to vector<16x16xf32>
    %23 = arith.select %6, %22, %21 : vector<16x16xi1>, vector<16x16xf32>
    %cst_9 = arith.constant 1.000000e+00 : f32
    %24 = vector.broadcast %cst_9 : f32 to vector<16x16xf32>
    %25 = arith.divf %24, %21 : vector<16x16xf32>
    %cst_10 = arith.constant 0.000000e+00 : f32
    %26 = vector.broadcast %cst_10 : f32 to vector<16x16xf32>
    %27 = arith.select %6, %26, %25 : vector<16x16xi1>, vector<16x16xf32>
    %28 = vector.extract_strided_slice %3 {offsets = [0, 0], sizes = [8, 8], strides = [1, 1]} : vector<16x16xf32> to vector<8x8xf32>
    %29 = vector.extract_strided_slice %3 {offsets = [8, 8], sizes = [8, 8], strides = [1, 1]} : vector<16x16xf32> to vector<8x8xf32>
    %30 = vector.extract_strided_slice %23 {offsets = [0, 0], sizes = [8, 8], strides = [1, 1]} : vector<16x16xf32> to vector<8x8xf32>
    %31 = vector.extract_strided_slice %23 {offsets = [8, 8], sizes = [8, 8], strides = [1, 1]} : vector<16x16xf32> to vector<8x8xf32>
    %32 = vector.extract_strided_slice %27 {offsets = [0, 0], sizes = [8, 8], strides = [1, 1]} : vector<16x16xf32> to vector<8x8xf32>
    %33 = vector.extract_strided_slice %27 {offsets = [8, 8], sizes = [8, 8], strides = [1, 1]} : vector<16x16xf32> to vector<8x8xf32>
    %34 = vector.shape_cast %30 : vector<8x8xf32> to vector<1x8x8xf32>
    %cst_11 = arith.constant dense<0.000000e+00> : vector<1xf32>
    %35 = vector.multi_reduction <add>, %34, %cst_11 [1, 2] : vector<1x8x8xf32> to vector<1xf32>
    %36 = vector.shape_cast %35 : vector<1xf32> to vector<1x1x1xf32>
    %37 = vector.extract %36[0, 0, 0] : f32 from vector<1x1x1xf32>
    %cst_12 = arith.constant 5.600000e+01 : f32
    %38 = arith.divf %cst_12, %37 : f32
    %39 = vector.broadcast %38 : f32 to vector<8x8xf32>
    %40 = arith.mulf %30, %39 : vector<8x8xf32>
    %41 = vector.shape_cast %31 : vector<8x8xf32> to vector<1x8x8xf32>
    %cst_13 = arith.constant dense<0.000000e+00> : vector<1xf32>
    %42 = vector.multi_reduction <add>, %41, %cst_13 [1, 2] : vector<1x8x8xf32> to vector<1xf32>
    %43 = vector.shape_cast %42 : vector<1xf32> to vector<1x1x1xf32>
    %44 = vector.extract %43[0, 0, 0] : f32 from vector<1x1x1xf32>
    %cst_14 = arith.constant 5.600000e+01 : f32
    %45 = arith.divf %cst_14, %44 : f32
    %46 = vector.broadcast %45 : f32 to vector<8x8xf32>
    %47 = arith.mulf %31, %46 : vector<8x8xf32>
    %cst_15 = arith.constant 0.000000e+00 : f32
    %48 = vector.broadcast %cst_15 : f32 to vector<8x8xf32>
    %49 = vector.extract_strided_slice %28 {offsets = [0, 0], sizes = [1, 8], strides = [1, 1]} : vector<8x8xf32> to vector<1x8xf32>
    %50 = vector.extract_strided_slice %28 {offsets = [0, 0], sizes = [8, 1], strides = [1, 1]} : vector<8x8xf32> to vector<8x1xf32>
    %51 = vector.extract_strided_slice %49 {offsets = [0, 0], sizes = [1, 1], strides = [1, 1]} : vector<1x8xf32> to vector<1x1xf32>
    %52 = vector.broadcast %50 : vector<8x1xf32> to vector<8x8xf32>
    %53 = arith.subf %28, %52 : vector<8x8xf32>
    %54 = vector.broadcast %49 : vector<1x8xf32> to vector<8x8xf32>
    %55 = arith.subf %53, %54 : vector<8x8xf32>
    %56 = vector.broadcast %51 : vector<1x1xf32> to vector<8x8xf32>
    %57 = arith.addf %55, %56 : vector<8x8xf32>
    %58 = vector.extract_strided_slice %32 {offsets = [0, 0], sizes = [8, 1], strides = [1, 1]} : vector<8x8xf32> to vector<8x1xf32>
    %59 = vector.extract_strided_slice %32 {offsets = [0, 0], sizes = [1, 8], strides = [1, 1]} : vector<8x8xf32> to vector<1x8xf32>
    %60 = vector.broadcast %58 : vector<8x1xf32> to vector<8x8xf32>
    %61 = vector.broadcast %59 : vector<1x8xf32> to vector<8x8xf32>
    %62 = arith.mulf %60, %61 : vector<8x8xf32>
    %63 = arith.mulf %57, %62 : vector<8x8xf32>
    %64 = vector.extract_strided_slice %29 {offsets = [0, 0], sizes = [1, 8], strides = [1, 1]} : vector<8x8xf32> to vector<1x8xf32>
    %65 = vector.extract_strided_slice %29 {offsets = [0, 0], sizes = [8, 1], strides = [1, 1]} : vector<8x8xf32> to vector<8x1xf32>
    %66 = vector.extract_strided_slice %64 {offsets = [0, 0], sizes = [1, 1], strides = [1, 1]} : vector<1x8xf32> to vector<1x1xf32>
    %67 = vector.broadcast %65 : vector<8x1xf32> to vector<8x8xf32>
    %68 = arith.subf %29, %67 : vector<8x8xf32>
    %69 = vector.broadcast %64 : vector<1x8xf32> to vector<8x8xf32>
    %70 = arith.subf %68, %69 : vector<8x8xf32>
    %71 = vector.broadcast %66 : vector<1x1xf32> to vector<8x8xf32>
    %72 = arith.addf %70, %71 : vector<8x8xf32>
    %73 = vector.extract_strided_slice %33 {offsets = [0, 0], sizes = [8, 1], strides = [1, 1]} : vector<8x8xf32> to vector<8x1xf32>
    %74 = vector.extract_strided_slice %33 {offsets = [0, 0], sizes = [1, 8], strides = [1, 1]} : vector<8x8xf32> to vector<1x8xf32>
    %75 = vector.broadcast %73 : vector<8x1xf32> to vector<8x8xf32>
    %76 = vector.broadcast %74 : vector<1x8xf32> to vector<8x8xf32>
    %77 = arith.mulf %75, %76 : vector<8x8xf32>
    %78 = arith.mulf %72, %77 : vector<8x8xf32>
    %79 = arith.subf %63, %78 : vector<8x8xf32>
    %80 = math.absf %79 : vector<8x8xf32>
    %cst_16 = arith.constant 1.000000e+00 : f32
    %81 = vector.broadcast %cst_16 : f32 to vector<8x8xf32>
    %82 = arith.cmpf olt, %80, %81 : vector<8x8xf32>
    %cst_17 = arith.constant 5.000000e-01 : f32
    %83 = vector.broadcast %cst_17 : f32 to vector<8x8xf32>
    %84 = arith.mulf %83, %80 : vector<8x8xf32>
    %85 = arith.mulf %84, %80 : vector<8x8xf32>
    %cst_18 = arith.constant 5.000000e-01 : f32
    %86 = vector.broadcast %cst_18 : f32 to vector<8x8xf32>
    %87 = arith.subf %80, %86 : vector<8x8xf32>
    %88 = arith.select %82, %85, %87 : vector<8x8xi1>, vector<8x8xf32>
    %89 = arith.addf %48, %88 : vector<8x8xf32>
    %90 = vector.extract_strided_slice %28 {offsets = [1, 0], sizes = [1, 8], strides = [1, 1]} : vector<8x8xf32> to vector<1x8xf32>
    %91 = vector.extract_strided_slice %28 {offsets = [0, 1], sizes = [8, 1], strides = [1, 1]} : vector<8x8xf32> to vector<8x1xf32>
    %92 = vector.extract_strided_slice %90 {offsets = [0, 1], sizes = [1, 1], strides = [1, 1]} : vector<1x8xf32> to vector<1x1xf32>
    %93 = vector.broadcast %91 : vector<8x1xf32> to vector<8x8xf32>
    %94 = arith.subf %28, %93 : vector<8x8xf32>
    %95 = vector.broadcast %90 : vector<1x8xf32> to vector<8x8xf32>
    %96 = arith.subf %94, %95 : vector<8x8xf32>
    %97 = vector.broadcast %92 : vector<1x1xf32> to vector<8x8xf32>
    %98 = arith.addf %96, %97 : vector<8x8xf32>
    %99 = vector.extract_strided_slice %32 {offsets = [0, 1], sizes = [8, 1], strides = [1, 1]} : vector<8x8xf32> to vector<8x1xf32>
    %100 = vector.extract_strided_slice %32 {offsets = [1, 0], sizes = [1, 8], strides = [1, 1]} : vector<8x8xf32> to vector<1x8xf32>
    %101 = vector.broadcast %99 : vector<8x1xf32> to vector<8x8xf32>
    %102 = vector.broadcast %100 : vector<1x8xf32> to vector<8x8xf32>
    %103 = arith.mulf %101, %102 : vector<8x8xf32>
    %104 = arith.mulf %98, %103 : vector<8x8xf32>
    %105 = vector.extract_strided_slice %29 {offsets = [1, 0], sizes = [1, 8], strides = [1, 1]} : vector<8x8xf32> to vector<1x8xf32>
    %106 = vector.extract_strided_slice %29 {offsets = [0, 1], sizes = [8, 1], strides = [1, 1]} : vector<8x8xf32> to vector<8x1xf32>
    %107 = vector.extract_strided_slice %105 {offsets = [0, 1], sizes = [1, 1], strides = [1, 1]} : vector<1x8xf32> to vector<1x1xf32>
    %108 = vector.broadcast %106 : vector<8x1xf32> to vector<8x8xf32>
    %109 = arith.subf %29, %108 : vector<8x8xf32>
    %110 = vector.broadcast %105 : vector<1x8xf32> to vector<8x8xf32>
    %111 = arith.subf %109, %110 : vector<8x8xf32>
    %112 = vector.broadcast %107 : vector<1x1xf32> to vector<8x8xf32>
    %113 = arith.addf %111, %112 : vector<8x8xf32>
    %114 = vector.extract_strided_slice %33 {offsets = [0, 1], sizes = [8, 1], strides = [1, 1]} : vector<8x8xf32> to vector<8x1xf32>
    %115 = vector.extract_strided_slice %33 {offsets = [1, 0], sizes = [1, 8], strides = [1, 1]} : vector<8x8xf32> to vector<1x8xf32>
    %116 = vector.broadcast %114 : vector<8x1xf32> to vector<8x8xf32>
    %117 = vector.broadcast %115 : vector<1x8xf32> to vector<8x8xf32>
    %118 = arith.mulf %116, %117 : vector<8x8xf32>
    %119 = arith.mulf %113, %118 : vector<8x8xf32>
    %120 = arith.subf %104, %119 : vector<8x8xf32>
    %121 = math.absf %120 : vector<8x8xf32>
    %cst_19 = arith.constant 1.000000e+00 : f32
    %122 = vector.broadcast %cst_19 : f32 to vector<8x8xf32>
    %123 = arith.cmpf olt, %121, %122 : vector<8x8xf32>
    %cst_20 = arith.constant 5.000000e-01 : f32
    %124 = vector.broadcast %cst_20 : f32 to vector<8x8xf32>
    %125 = arith.mulf %124, %121 : vector<8x8xf32>
    %126 = arith.mulf %125, %121 : vector<8x8xf32>
    %cst_21 = arith.constant 5.000000e-01 : f32
    %127 = vector.broadcast %cst_21 : f32 to vector<8x8xf32>
    %128 = arith.subf %121, %127 : vector<8x8xf32>
    %129 = arith.select %123, %126, %128 : vector<8x8xi1>, vector<8x8xf32>
    %130 = arith.addf %89, %129 : vector<8x8xf32>
    %131 = vector.extract_strided_slice %28 {offsets = [2, 0], sizes = [1, 8], strides = [1, 1]} : vector<8x8xf32> to vector<1x8xf32>
    %132 = vector.extract_strided_slice %28 {offsets = [0, 2], sizes = [8, 1], strides = [1, 1]} : vector<8x8xf32> to vector<8x1xf32>
    %133 = vector.extract_strided_slice %131 {offsets = [0, 2], sizes = [1, 1], strides = [1, 1]} : vector<1x8xf32> to vector<1x1xf32>
    %134 = vector.broadcast %132 : vector<8x1xf32> to vector<8x8xf32>
    %135 = arith.subf %28, %134 : vector<8x8xf32>
    %136 = vector.broadcast %131 : vector<1x8xf32> to vector<8x8xf32>
    %137 = arith.subf %135, %136 : vector<8x8xf32>
    %138 = vector.broadcast %133 : vector<1x1xf32> to vector<8x8xf32>
    %139 = arith.addf %137, %138 : vector<8x8xf32>
    %140 = vector.extract_strided_slice %32 {offsets = [0, 2], sizes = [8, 1], strides = [1, 1]} : vector<8x8xf32> to vector<8x1xf32>
    %141 = vector.extract_strided_slice %32 {offsets = [2, 0], sizes = [1, 8], strides = [1, 1]} : vector<8x8xf32> to vector<1x8xf32>
    %142 = vector.broadcast %140 : vector<8x1xf32> to vector<8x8xf32>
    %143 = vector.broadcast %141 : vector<1x8xf32> to vector<8x8xf32>
    %144 = arith.mulf %142, %143 : vector<8x8xf32>
    %145 = arith.mulf %139, %144 : vector<8x8xf32>
    %146 = vector.extract_strided_slice %29 {offsets = [2, 0], sizes = [1, 8], strides = [1, 1]} : vector<8x8xf32> to vector<1x8xf32>
    %147 = vector.extract_strided_slice %29 {offsets = [0, 2], sizes = [8, 1], strides = [1, 1]} : vector<8x8xf32> to vector<8x1xf32>
    %148 = vector.extract_strided_slice %146 {offsets = [0, 2], sizes = [1, 1], strides = [1, 1]} : vector<1x8xf32> to vector<1x1xf32>
    %149 = vector.broadcast %147 : vector<8x1xf32> to vector<8x8xf32>
    %150 = arith.subf %29, %149 : vector<8x8xf32>
    %151 = vector.broadcast %146 : vector<1x8xf32> to vector<8x8xf32>
    %152 = arith.subf %150, %151 : vector<8x8xf32>
    %153 = vector.broadcast %148 : vector<1x1xf32> to vector<8x8xf32>
    %154 = arith.addf %152, %153 : vector<8x8xf32>
    %155 = vector.extract_strided_slice %33 {offsets = [0, 2], sizes = [8, 1], strides = [1, 1]} : vector<8x8xf32> to vector<8x1xf32>
    %156 = vector.extract_strided_slice %33 {offsets = [2, 0], sizes = [1, 8], strides = [1, 1]} : vector<8x8xf32> to vector<1x8xf32>
    %157 = vector.broadcast %155 : vector<8x1xf32> to vector<8x8xf32>
    %158 = vector.broadcast %156 : vector<1x8xf32> to vector<8x8xf32>
    %159 = arith.mulf %157, %158 : vector<8x8xf32>
    %160 = arith.mulf %154, %159 : vector<8x8xf32>
    %161 = arith.subf %145, %160 : vector<8x8xf32>
    %162 = math.absf %161 : vector<8x8xf32>
    %cst_22 = arith.constant 1.000000e+00 : f32
    %163 = vector.broadcast %cst_22 : f32 to vector<8x8xf32>
    %164 = arith.cmpf olt, %162, %163 : vector<8x8xf32>
    %cst_23 = arith.constant 5.000000e-01 : f32
    %165 = vector.broadcast %cst_23 : f32 to vector<8x8xf32>
    %166 = arith.mulf %165, %162 : vector<8x8xf32>
    %167 = arith.mulf %166, %162 : vector<8x8xf32>
    %cst_24 = arith.constant 5.000000e-01 : f32
    %168 = vector.broadcast %cst_24 : f32 to vector<8x8xf32>
    %169 = arith.subf %162, %168 : vector<8x8xf32>
    %170 = arith.select %164, %167, %169 : vector<8x8xi1>, vector<8x8xf32>
    %171 = arith.addf %130, %170 : vector<8x8xf32>
    %172 = vector.extract_strided_slice %28 {offsets = [3, 0], sizes = [1, 8], strides = [1, 1]} : vector<8x8xf32> to vector<1x8xf32>
    %173 = vector.extract_strided_slice %28 {offsets = [0, 3], sizes = [8, 1], strides = [1, 1]} : vector<8x8xf32> to vector<8x1xf32>
    %174 = vector.extract_strided_slice %172 {offsets = [0, 3], sizes = [1, 1], strides = [1, 1]} : vector<1x8xf32> to vector<1x1xf32>
    %175 = vector.broadcast %173 : vector<8x1xf32> to vector<8x8xf32>
    %176 = arith.subf %28, %175 : vector<8x8xf32>
    %177 = vector.broadcast %172 : vector<1x8xf32> to vector<8x8xf32>
    %178 = arith.subf %176, %177 : vector<8x8xf32>
    %179 = vector.broadcast %174 : vector<1x1xf32> to vector<8x8xf32>
    %180 = arith.addf %178, %179 : vector<8x8xf32>
    %181 = vector.extract_strided_slice %32 {offsets = [0, 3], sizes = [8, 1], strides = [1, 1]} : vector<8x8xf32> to vector<8x1xf32>
    %182 = vector.extract_strided_slice %32 {offsets = [3, 0], sizes = [1, 8], strides = [1, 1]} : vector<8x8xf32> to vector<1x8xf32>
    %183 = vector.broadcast %181 : vector<8x1xf32> to vector<8x8xf32>
    %184 = vector.broadcast %182 : vector<1x8xf32> to vector<8x8xf32>
    %185 = arith.mulf %183, %184 : vector<8x8xf32>
    %186 = arith.mulf %180, %185 : vector<8x8xf32>
    %187 = vector.extract_strided_slice %29 {offsets = [3, 0], sizes = [1, 8], strides = [1, 1]} : vector<8x8xf32> to vector<1x8xf32>
    %188 = vector.extract_strided_slice %29 {offsets = [0, 3], sizes = [8, 1], strides = [1, 1]} : vector<8x8xf32> to vector<8x1xf32>
    %189 = vector.extract_strided_slice %187 {offsets = [0, 3], sizes = [1, 1], strides = [1, 1]} : vector<1x8xf32> to vector<1x1xf32>
    %190 = vector.broadcast %188 : vector<8x1xf32> to vector<8x8xf32>
    %191 = arith.subf %29, %190 : vector<8x8xf32>
    %192 = vector.broadcast %187 : vector<1x8xf32> to vector<8x8xf32>
    %193 = arith.subf %191, %192 : vector<8x8xf32>
    %194 = vector.broadcast %189 : vector<1x1xf32> to vector<8x8xf32>
    %195 = arith.addf %193, %194 : vector<8x8xf32>
    %196 = vector.extract_strided_slice %33 {offsets = [0, 3], sizes = [8, 1], strides = [1, 1]} : vector<8x8xf32> to vector<8x1xf32>
    %197 = vector.extract_strided_slice %33 {offsets = [3, 0], sizes = [1, 8], strides = [1, 1]} : vector<8x8xf32> to vector<1x8xf32>
    %198 = vector.broadcast %196 : vector<8x1xf32> to vector<8x8xf32>
    %199 = vector.broadcast %197 : vector<1x8xf32> to vector<8x8xf32>
    %200 = arith.mulf %198, %199 : vector<8x8xf32>
    %201 = arith.mulf %195, %200 : vector<8x8xf32>
    %202 = arith.subf %186, %201 : vector<8x8xf32>
    %203 = math.absf %202 : vector<8x8xf32>
    %cst_25 = arith.constant 1.000000e+00 : f32
    %204 = vector.broadcast %cst_25 : f32 to vector<8x8xf32>
    %205 = arith.cmpf olt, %203, %204 : vector<8x8xf32>
    %cst_26 = arith.constant 5.000000e-01 : f32
    %206 = vector.broadcast %cst_26 : f32 to vector<8x8xf32>
    %207 = arith.mulf %206, %203 : vector<8x8xf32>
    %208 = arith.mulf %207, %203 : vector<8x8xf32>
    %cst_27 = arith.constant 5.000000e-01 : f32
    %209 = vector.broadcast %cst_27 : f32 to vector<8x8xf32>
    %210 = arith.subf %203, %209 : vector<8x8xf32>
    %211 = arith.select %205, %208, %210 : vector<8x8xi1>, vector<8x8xf32>
    %212 = arith.addf %171, %211 : vector<8x8xf32>
    %213 = vector.extract_strided_slice %28 {offsets = [4, 0], sizes = [1, 8], strides = [1, 1]} : vector<8x8xf32> to vector<1x8xf32>
    %214 = vector.extract_strided_slice %28 {offsets = [0, 4], sizes = [8, 1], strides = [1, 1]} : vector<8x8xf32> to vector<8x1xf32>
    %215 = vector.extract_strided_slice %213 {offsets = [0, 4], sizes = [1, 1], strides = [1, 1]} : vector<1x8xf32> to vector<1x1xf32>
    %216 = vector.broadcast %214 : vector<8x1xf32> to vector<8x8xf32>
    %217 = arith.subf %28, %216 : vector<8x8xf32>
    %218 = vector.broadcast %213 : vector<1x8xf32> to vector<8x8xf32>
    %219 = arith.subf %217, %218 : vector<8x8xf32>
    %220 = vector.broadcast %215 : vector<1x1xf32> to vector<8x8xf32>
    %221 = arith.addf %219, %220 : vector<8x8xf32>
    %222 = vector.extract_strided_slice %32 {offsets = [0, 4], sizes = [8, 1], strides = [1, 1]} : vector<8x8xf32> to vector<8x1xf32>
    %223 = vector.extract_strided_slice %32 {offsets = [4, 0], sizes = [1, 8], strides = [1, 1]} : vector<8x8xf32> to vector<1x8xf32>
    %224 = vector.broadcast %222 : vector<8x1xf32> to vector<8x8xf32>
    %225 = vector.broadcast %223 : vector<1x8xf32> to vector<8x8xf32>
    %226 = arith.mulf %224, %225 : vector<8x8xf32>
    %227 = arith.mulf %221, %226 : vector<8x8xf32>
    %228 = vector.extract_strided_slice %29 {offsets = [4, 0], sizes = [1, 8], strides = [1, 1]} : vector<8x8xf32> to vector<1x8xf32>
    %229 = vector.extract_strided_slice %29 {offsets = [0, 4], sizes = [8, 1], strides = [1, 1]} : vector<8x8xf32> to vector<8x1xf32>
    %230 = vector.extract_strided_slice %228 {offsets = [0, 4], sizes = [1, 1], strides = [1, 1]} : vector<1x8xf32> to vector<1x1xf32>
    %231 = vector.broadcast %229 : vector<8x1xf32> to vector<8x8xf32>
    %232 = arith.subf %29, %231 : vector<8x8xf32>
    %233 = vector.broadcast %228 : vector<1x8xf32> to vector<8x8xf32>
    %234 = arith.subf %232, %233 : vector<8x8xf32>
    %235 = vector.broadcast %230 : vector<1x1xf32> to vector<8x8xf32>
    %236 = arith.addf %234, %235 : vector<8x8xf32>
    %237 = vector.extract_strided_slice %33 {offsets = [0, 4], sizes = [8, 1], strides = [1, 1]} : vector<8x8xf32> to vector<8x1xf32>
    %238 = vector.extract_strided_slice %33 {offsets = [4, 0], sizes = [1, 8], strides = [1, 1]} : vector<8x8xf32> to vector<1x8xf32>
    %239 = vector.broadcast %237 : vector<8x1xf32> to vector<8x8xf32>
    %240 = vector.broadcast %238 : vector<1x8xf32> to vector<8x8xf32>
    %241 = arith.mulf %239, %240 : vector<8x8xf32>
    %242 = arith.mulf %236, %241 : vector<8x8xf32>
    %243 = arith.subf %227, %242 : vector<8x8xf32>
    %244 = math.absf %243 : vector<8x8xf32>
    %cst_28 = arith.constant 1.000000e+00 : f32
    %245 = vector.broadcast %cst_28 : f32 to vector<8x8xf32>
    %246 = arith.cmpf olt, %244, %245 : vector<8x8xf32>
    %cst_29 = arith.constant 5.000000e-01 : f32
    %247 = vector.broadcast %cst_29 : f32 to vector<8x8xf32>
    %248 = arith.mulf %247, %244 : vector<8x8xf32>
    %249 = arith.mulf %248, %244 : vector<8x8xf32>
    %cst_30 = arith.constant 5.000000e-01 : f32
    %250 = vector.broadcast %cst_30 : f32 to vector<8x8xf32>
    %251 = arith.subf %244, %250 : vector<8x8xf32>
    %252 = arith.select %246, %249, %251 : vector<8x8xi1>, vector<8x8xf32>
    %253 = arith.addf %212, %252 : vector<8x8xf32>
    %254 = vector.extract_strided_slice %28 {offsets = [5, 0], sizes = [1, 8], strides = [1, 1]} : vector<8x8xf32> to vector<1x8xf32>
    %255 = vector.extract_strided_slice %28 {offsets = [0, 5], sizes = [8, 1], strides = [1, 1]} : vector<8x8xf32> to vector<8x1xf32>
    %256 = vector.extract_strided_slice %254 {offsets = [0, 5], sizes = [1, 1], strides = [1, 1]} : vector<1x8xf32> to vector<1x1xf32>
    %257 = vector.broadcast %255 : vector<8x1xf32> to vector<8x8xf32>
    %258 = arith.subf %28, %257 : vector<8x8xf32>
    %259 = vector.broadcast %254 : vector<1x8xf32> to vector<8x8xf32>
    %260 = arith.subf %258, %259 : vector<8x8xf32>
    %261 = vector.broadcast %256 : vector<1x1xf32> to vector<8x8xf32>
    %262 = arith.addf %260, %261 : vector<8x8xf32>
    %263 = vector.extract_strided_slice %32 {offsets = [0, 5], sizes = [8, 1], strides = [1, 1]} : vector<8x8xf32> to vector<8x1xf32>
    %264 = vector.extract_strided_slice %32 {offsets = [5, 0], sizes = [1, 8], strides = [1, 1]} : vector<8x8xf32> to vector<1x8xf32>
    %265 = vector.broadcast %263 : vector<8x1xf32> to vector<8x8xf32>
    %266 = vector.broadcast %264 : vector<1x8xf32> to vector<8x8xf32>
    %267 = arith.mulf %265, %266 : vector<8x8xf32>
    %268 = arith.mulf %262, %267 : vector<8x8xf32>
    %269 = vector.extract_strided_slice %29 {offsets = [5, 0], sizes = [1, 8], strides = [1, 1]} : vector<8x8xf32> to vector<1x8xf32>
    %270 = vector.extract_strided_slice %29 {offsets = [0, 5], sizes = [8, 1], strides = [1, 1]} : vector<8x8xf32> to vector<8x1xf32>
    %271 = vector.extract_strided_slice %269 {offsets = [0, 5], sizes = [1, 1], strides = [1, 1]} : vector<1x8xf32> to vector<1x1xf32>
    %272 = vector.broadcast %270 : vector<8x1xf32> to vector<8x8xf32>
    %273 = arith.subf %29, %272 : vector<8x8xf32>
    %274 = vector.broadcast %269 : vector<1x8xf32> to vector<8x8xf32>
    %275 = arith.subf %273, %274 : vector<8x8xf32>
    %276 = vector.broadcast %271 : vector<1x1xf32> to vector<8x8xf32>
    %277 = arith.addf %275, %276 : vector<8x8xf32>
    %278 = vector.extract_strided_slice %33 {offsets = [0, 5], sizes = [8, 1], strides = [1, 1]} : vector<8x8xf32> to vector<8x1xf32>
    %279 = vector.extract_strided_slice %33 {offsets = [5, 0], sizes = [1, 8], strides = [1, 1]} : vector<8x8xf32> to vector<1x8xf32>
    %280 = vector.broadcast %278 : vector<8x1xf32> to vector<8x8xf32>
    %281 = vector.broadcast %279 : vector<1x8xf32> to vector<8x8xf32>
    %282 = arith.mulf %280, %281 : vector<8x8xf32>
    %283 = arith.mulf %277, %282 : vector<8x8xf32>
    %284 = arith.subf %268, %283 : vector<8x8xf32>
    %285 = math.absf %284 : vector<8x8xf32>
    %cst_31 = arith.constant 1.000000e+00 : f32
    %286 = vector.broadcast %cst_31 : f32 to vector<8x8xf32>
    %287 = arith.cmpf olt, %285, %286 : vector<8x8xf32>
    %cst_32 = arith.constant 5.000000e-01 : f32
    %288 = vector.broadcast %cst_32 : f32 to vector<8x8xf32>
    %289 = arith.mulf %288, %285 : vector<8x8xf32>
    %290 = arith.mulf %289, %285 : vector<8x8xf32>
    %cst_33 = arith.constant 5.000000e-01 : f32
    %291 = vector.broadcast %cst_33 : f32 to vector<8x8xf32>
    %292 = arith.subf %285, %291 : vector<8x8xf32>
    %293 = arith.select %287, %290, %292 : vector<8x8xi1>, vector<8x8xf32>
    %294 = arith.addf %253, %293 : vector<8x8xf32>
    %295 = vector.extract_strided_slice %28 {offsets = [6, 0], sizes = [1, 8], strides = [1, 1]} : vector<8x8xf32> to vector<1x8xf32>
    %296 = vector.extract_strided_slice %28 {offsets = [0, 6], sizes = [8, 1], strides = [1, 1]} : vector<8x8xf32> to vector<8x1xf32>
    %297 = vector.extract_strided_slice %295 {offsets = [0, 6], sizes = [1, 1], strides = [1, 1]} : vector<1x8xf32> to vector<1x1xf32>
    %298 = vector.broadcast %296 : vector<8x1xf32> to vector<8x8xf32>
    %299 = arith.subf %28, %298 : vector<8x8xf32>
    %300 = vector.broadcast %295 : vector<1x8xf32> to vector<8x8xf32>
    %301 = arith.subf %299, %300 : vector<8x8xf32>
    %302 = vector.broadcast %297 : vector<1x1xf32> to vector<8x8xf32>
    %303 = arith.addf %301, %302 : vector<8x8xf32>
    %304 = vector.extract_strided_slice %32 {offsets = [0, 6], sizes = [8, 1], strides = [1, 1]} : vector<8x8xf32> to vector<8x1xf32>
    %305 = vector.extract_strided_slice %32 {offsets = [6, 0], sizes = [1, 8], strides = [1, 1]} : vector<8x8xf32> to vector<1x8xf32>
    %306 = vector.broadcast %304 : vector<8x1xf32> to vector<8x8xf32>
    %307 = vector.broadcast %305 : vector<1x8xf32> to vector<8x8xf32>
    %308 = arith.mulf %306, %307 : vector<8x8xf32>
    %309 = arith.mulf %303, %308 : vector<8x8xf32>
    %310 = vector.extract_strided_slice %29 {offsets = [6, 0], sizes = [1, 8], strides = [1, 1]} : vector<8x8xf32> to vector<1x8xf32>
    %311 = vector.extract_strided_slice %29 {offsets = [0, 6], sizes = [8, 1], strides = [1, 1]} : vector<8x8xf32> to vector<8x1xf32>
    %312 = vector.extract_strided_slice %310 {offsets = [0, 6], sizes = [1, 1], strides = [1, 1]} : vector<1x8xf32> to vector<1x1xf32>
    %313 = vector.broadcast %311 : vector<8x1xf32> to vector<8x8xf32>
    %314 = arith.subf %29, %313 : vector<8x8xf32>
    %315 = vector.broadcast %310 : vector<1x8xf32> to vector<8x8xf32>
    %316 = arith.subf %314, %315 : vector<8x8xf32>
    %317 = vector.broadcast %312 : vector<1x1xf32> to vector<8x8xf32>
    %318 = arith.addf %316, %317 : vector<8x8xf32>
    %319 = vector.extract_strided_slice %33 {offsets = [0, 6], sizes = [8, 1], strides = [1, 1]} : vector<8x8xf32> to vector<8x1xf32>
    %320 = vector.extract_strided_slice %33 {offsets = [6, 0], sizes = [1, 8], strides = [1, 1]} : vector<8x8xf32> to vector<1x8xf32>
    %321 = vector.broadcast %319 : vector<8x1xf32> to vector<8x8xf32>
    %322 = vector.broadcast %320 : vector<1x8xf32> to vector<8x8xf32>
    %323 = arith.mulf %321, %322 : vector<8x8xf32>
    %324 = arith.mulf %318, %323 : vector<8x8xf32>
    %325 = arith.subf %309, %324 : vector<8x8xf32>
    %326 = math.absf %325 : vector<8x8xf32>
    %cst_34 = arith.constant 1.000000e+00 : f32
    %327 = vector.broadcast %cst_34 : f32 to vector<8x8xf32>
    %328 = arith.cmpf olt, %326, %327 : vector<8x8xf32>
    %cst_35 = arith.constant 5.000000e-01 : f32
    %329 = vector.broadcast %cst_35 : f32 to vector<8x8xf32>
    %330 = arith.mulf %329, %326 : vector<8x8xf32>
    %331 = arith.mulf %330, %326 : vector<8x8xf32>
    %cst_36 = arith.constant 5.000000e-01 : f32
    %332 = vector.broadcast %cst_36 : f32 to vector<8x8xf32>
    %333 = arith.subf %326, %332 : vector<8x8xf32>
    %334 = arith.select %328, %331, %333 : vector<8x8xi1>, vector<8x8xf32>
    %335 = arith.addf %294, %334 : vector<8x8xf32>
    %336 = vector.extract_strided_slice %28 {offsets = [7, 0], sizes = [1, 8], strides = [1, 1]} : vector<8x8xf32> to vector<1x8xf32>
    %337 = vector.extract_strided_slice %28 {offsets = [0, 7], sizes = [8, 1], strides = [1, 1]} : vector<8x8xf32> to vector<8x1xf32>
    %338 = vector.extract_strided_slice %336 {offsets = [0, 7], sizes = [1, 1], strides = [1, 1]} : vector<1x8xf32> to vector<1x1xf32>
    %339 = vector.broadcast %337 : vector<8x1xf32> to vector<8x8xf32>
    %340 = arith.subf %28, %339 : vector<8x8xf32>
    %341 = vector.broadcast %336 : vector<1x8xf32> to vector<8x8xf32>
    %342 = arith.subf %340, %341 : vector<8x8xf32>
    %343 = vector.broadcast %338 : vector<1x1xf32> to vector<8x8xf32>
    %344 = arith.addf %342, %343 : vector<8x8xf32>
    %345 = vector.extract_strided_slice %32 {offsets = [0, 7], sizes = [8, 1], strides = [1, 1]} : vector<8x8xf32> to vector<8x1xf32>
    %346 = vector.extract_strided_slice %32 {offsets = [7, 0], sizes = [1, 8], strides = [1, 1]} : vector<8x8xf32> to vector<1x8xf32>
    %347 = vector.broadcast %345 : vector<8x1xf32> to vector<8x8xf32>
    %348 = vector.broadcast %346 : vector<1x8xf32> to vector<8x8xf32>
    %349 = arith.mulf %347, %348 : vector<8x8xf32>
    %350 = arith.mulf %344, %349 : vector<8x8xf32>
    %351 = vector.extract_strided_slice %29 {offsets = [7, 0], sizes = [1, 8], strides = [1, 1]} : vector<8x8xf32> to vector<1x8xf32>
    %352 = vector.extract_strided_slice %29 {offsets = [0, 7], sizes = [8, 1], strides = [1, 1]} : vector<8x8xf32> to vector<8x1xf32>
    %353 = vector.extract_strided_slice %351 {offsets = [0, 7], sizes = [1, 1], strides = [1, 1]} : vector<1x8xf32> to vector<1x1xf32>
    %354 = vector.broadcast %352 : vector<8x1xf32> to vector<8x8xf32>
    %355 = arith.subf %29, %354 : vector<8x8xf32>
    %356 = vector.broadcast %351 : vector<1x8xf32> to vector<8x8xf32>
    %357 = arith.subf %355, %356 : vector<8x8xf32>
    %358 = vector.broadcast %353 : vector<1x1xf32> to vector<8x8xf32>
    %359 = arith.addf %357, %358 : vector<8x8xf32>
    %360 = vector.extract_strided_slice %33 {offsets = [0, 7], sizes = [8, 1], strides = [1, 1]} : vector<8x8xf32> to vector<8x1xf32>
    %361 = vector.extract_strided_slice %33 {offsets = [7, 0], sizes = [1, 8], strides = [1, 1]} : vector<8x8xf32> to vector<1x8xf32>
    %362 = vector.broadcast %360 : vector<8x1xf32> to vector<8x8xf32>
    %363 = vector.broadcast %361 : vector<1x8xf32> to vector<8x8xf32>
    %364 = arith.mulf %362, %363 : vector<8x8xf32>
    %365 = arith.mulf %359, %364 : vector<8x8xf32>
    %366 = arith.subf %350, %365 : vector<8x8xf32>
    %367 = math.absf %366 : vector<8x8xf32>
    %cst_37 = arith.constant 1.000000e+00 : f32
    %368 = vector.broadcast %cst_37 : f32 to vector<8x8xf32>
    %369 = arith.cmpf olt, %367, %368 : vector<8x8xf32>
    %cst_38 = arith.constant 5.000000e-01 : f32
    %370 = vector.broadcast %cst_38 : f32 to vector<8x8xf32>
    %371 = arith.mulf %370, %367 : vector<8x8xf32>
    %372 = arith.mulf %371, %367 : vector<8x8xf32>
    %cst_39 = arith.constant 5.000000e-01 : f32
    %373 = vector.broadcast %cst_39 : f32 to vector<8x8xf32>
    %374 = arith.subf %367, %373 : vector<8x8xf32>
    %375 = arith.select %369, %372, %374 : vector<8x8xi1>, vector<8x8xf32>
    %376 = arith.addf %335, %375 : vector<8x8xf32>
    %377 = arith.subf %40, %47 : vector<8x8xf32>
    %378 = math.absf %377 : vector<8x8xf32>
    %cst_40 = arith.constant 1.000000e+00 : f32
    %379 = vector.broadcast %cst_40 : f32 to vector<8x8xf32>
    %380 = arith.cmpf olt, %378, %379 : vector<8x8xf32>
    %cst_41 = arith.constant 5.000000e-01 : f32
    %381 = vector.broadcast %cst_41 : f32 to vector<8x8xf32>
    %382 = arith.mulf %381, %378 : vector<8x8xf32>
    %383 = arith.mulf %382, %378 : vector<8x8xf32>
    %cst_42 = arith.constant 5.000000e-01 : f32
    %384 = vector.broadcast %cst_42 : f32 to vector<8x8xf32>
    %385 = arith.subf %378, %384 : vector<8x8xf32>
    %386 = arith.select %380, %383, %385 : vector<8x8xi1>, vector<8x8xf32>
    %cst_43 = arith.constant 3.125000e-02 : f32
    %387 = vector.broadcast %cst_43 : f32 to vector<8x8xf32>
    %388 = arith.mulf %387, %386 : vector<8x8xf32>
    %cst_44 = arith.constant 0.005859375 : f32
    %389 = vector.broadcast %cst_44 : f32 to vector<8x8xf32>
    %390 = arith.mulf %389, %376 : vector<8x8xf32>
    %391 = arith.addf %388, %390 : vector<8x8xf32>
    %392 = vector.shape_cast %391 : vector<8x8xf32> to vector<1x8x8xf32>
    %cst_45 = arith.constant dense<0.000000e+00> : vector<1xf32>
    %393 = vector.multi_reduction <add>, %392, %cst_45 [1, 2] : vector<1x8x8xf32> to vector<1xf32>
    %394 = vector.shape_cast %393 : vector<1xf32> to vector<1x1x1xf32>
    %395 = vector.extract %394[0, 0, 0] : f32 from vector<1x1x1xf32>
    %c0_46 = arith.constant 0 : index
    %396 = memref.load %arg2[%c0_46] : memref<1xf32, #tpu.memory_space<smem>>
    memref.store %395, %arg2[%c0_46] : memref<1xf32, #tpu.memory_space<smem>>
    return
  }
}

</mosaic_0001>

<llo_original>
// kernel: tpu_custom_call.1
$region0: #{tpu_custom_call.1}
  #allocation0 [shape = 'u32[]', space=smem, size = 0x4, offset = 0x4, fixed_abs, tag = 'smem constant byte address 0x4 - core index']
  #allocation1 [shape = 'u32[144,128]{1,0:T(1,128)}', space=vmem, size = 0x12000, scoped, tag = 'internal scratch']
  %s0 = inlined_call_operand.hbm [shape: f32[8,1024], index: 0, kind: input, shape index: {}]
  %s1 = inlined_call_operand.hbm [shape: f32[8,1024], index: 1, kind: input, shape index: {}]
  %s2 = inlined_call_operand.hbm [shape: f32[1], index: 2, kind: output, shape index: {}]
  %s3 = sld [smem:[#allocation0]]
  $region26: #{tpu_custom_call.1} parent=0
    _
  %s5 = ssub.s32 1, %s3
  %s6 = scalar_select 0, %s5, %s3
  $region1: #{tpu_custom_call.1} parent=0
    #allocation2 [shape = 'u8[32768]{0}', space=vmem, size = 0x8000, scoped, tag = 'input window, operand 0, single buffered']
    #allocation3 [shape = 's32[1]{0}', space=sflag, size = 0x4, scoped, tag = 'scoped memory for tpu_custom_call.1']
    #allocation4 [shape = 's32[1]{0}', space=sflag, size = 0x4, scoped, tag = 'scoped memory for tpu_custom_call.1']
    #allocation5 [shape = 'u8[32768]{0}', space=vmem, size = 0x8000, scoped, tag = 'input window, operand 1, single buffered']
    #allocation6 [shape = 's32[1]{0}', space=sflag, size = 0x4, scoped, tag = 'scoped memory for tpu_custom_call.1']
    #allocation7 [shape = 'u8[512]{0}', space=smem, size = 0x200, scoped, tag = 'output window, operand 0, single buffered']
    %7 = vsyncpa [#allocation3], 0
    %8 = vsyncpa [#allocation6], 0
    %9 = vsyncpa [#allocation4], 0
    // Predicated region
    $region2: #{tpu_custom_call.1} parent=1 // pred_check
      _
    $region3: #{tpu_custom_call.1} parent=1 // pred_check_branch
      %11 = sbr.rel (0) target = $region5
    $region4: #{tpu_custom_call.1} parent=1 // pred_region
      %s13 = ssub.s32 1024, 1024
      %14 = vsyncadd [#allocation3], %s13
      %s16 = sshll.u32 [#allocation2], 4
      %s17 = int_to_ptr.vmem [resolvable:$true] %s16
      %19 = dma.hbm_to_vmem [thread:$0]  %s0, 1024, %s17, [#allocation3]
    $region5: #{tpu_custom_call.1} parent=1 // pred_fallthru
      _
    // Predicated region
    $region6: #{tpu_custom_call.1} parent=1 // pred_check
      _
    $region7: #{tpu_custom_call.1} parent=1 // pred_check_branch
      %21 = sbr.rel (0) target = $region9
    $region8: #{tpu_custom_call.1} parent=1 // pred_region
      %s23 = ssub.s32 1024, 1024
      %24 = vsyncadd [#allocation6], %s23
      %s26 = sshll.u32 [#allocation5], 4
      %s27 = int_to_ptr.vmem [resolvable:$true] %s26
      %29 = dma.hbm_to_vmem [thread:$0]  %s1, 1024, %s27, [#allocation6]
    $region9: #{tpu_custom_call.1} parent=1 // pred_fallthru
      _
    // Predicated region
    $region10: #{tpu_custom_call.1} parent=1 // pred_check
      _
    $region11: #{tpu_custom_call.1} parent=1 // pred_check_branch
      %31 = sbr.rel (0) target = $region13
    $region12: #{tpu_custom_call.1} parent=1 // pred_region
      %32 = dma.done [#allocation3], 1024
    $region13: #{tpu_custom_call.1} parent=1 // pred_fallthru
      _
    // Predicated region
    $region14: #{tpu_custom_call.1} parent=1 // pred_check
      _
    $region15: #{tpu_custom_call.1} parent=1 // pred_check_branch
      %34 = sbr.rel (0) target = $region17
    $region16: #{tpu_custom_call.1} parent=1 // pred_region
      %35 = dma.done [#allocation6], 1024
    $region17: #{tpu_custom_call.1} parent=1 // pred_fallthru
      _
    %v36 = vld [vmem:[#allocation2] sm:$0xff]
    %v37 = vld [vmem:[#allocation2 + $0x8] sm:$0xff]
    %v38 = vld [vmem:[#allocation2 + $0x10] sm:$0xff]
    %v39 = vld [vmem:[#allocation2 + $0x18] sm:$0xff]
    %v40 = vld [vmem:[#allocation2 + $0x20] sm:$0xff]
    %v41 = vld [vmem:[#allocation2 + $0x28] sm:$0xff]
    %v42 = vld [vmem:[#allocation2 + $0x30] sm:$0xff]
    %v43 = vld [vmem:[#allocation2 + $0x38] sm:$0xff]
    %v44 = vld [vmem:[#allocation5] sm:$0xff]
    %v45 = vld [vmem:[#allocation5 + $0x8] sm:$0xff]
    %v46 = vld [vmem:[#allocation5 + $0x10] sm:$0xff]
    %v47 = vld [vmem:[#allocation5 + $0x18] sm:$0xff]
    %v48 = vld [vmem:[#allocation5 + $0x20] sm:$0xff]
    %v49 = vld [vmem:[#allocation5 + $0x28] sm:$0xff]
    %v50 = vld [vmem:[#allocation5 + $0x30] sm:$0xff]
    %v51 = vld [vmem:[#allocation5 + $0x38] sm:$0xff]
    %52 = vmatprep.subr.mxu0 %v37
    %53 = vmatpush1.xpose.msra.mxu0 %v36
    %54 = vmatprep.subr.mxu0 %v45
    %55 = vmatpush1.xpose.msra.mxu0 %v44
    %56 = vmatprep.subr.mxu0 0.0
    %57 = vmatpush1.xpose.msra.mxu0 0.0
    %58 = vmatprep.subr.mxu0 0.0
    %59 = vmatpush1.xpose.msra.mxu0 0.0
    %60 = vmatprep.subr.mxu0 0.0
    %61 = vmatpush1.xpose.msra.mxu0 0.0
    %62 = vmatprep.subr.mxu0 0.0
    %63 = vmatpush1.xpose.msra.mxu0 0.0
    %64 = vmatprep.subr.mxu0 0.0
    %65 = vmatpush1.xpose.msra.mxu0 0.0
    %66 = vmatprep.subr.mxu0 0.0
    %67 = vmatpush1.xpose.msra.mxu0 0.0
    %68 = vmatprep.subr.mxu0 0.0
    %69 = vmatpush1.xpose.msra.mxu0 0.0
    %70 = vmatprep.subr.mxu0 0.0
    %71 = vmatpush1.xpose.msra.mxu0 0.0
    %72 = vmatprep.subr.mxu0 0.0
    %73 = vmatpush1.xpose.msra.mxu0 0.0
    %74 = vmatprep.subr.mxu0 0.0
    %75 = vmatpush1.xpose.msra.mxu0 0.0
    %76 = vmatprep.subr.mxu0 0.0
    %77 = vmatpush1.xpose.msra.mxu0 0.0
    %78 = vmatprep.subr.mxu0 0.0
    %79 = vmatpush1.xpose.msra.mxu0 0.0
    %80 = vmatprep.subr.mxu0 0.0
    %81 = vmatpush1.xpose.msra.mxu0 0.0
    %82 = vmatprep.subr.mxu0 0.0
    %83 = vmatpush1.xpose.msra.mxu0 0.0
    %84 = vmatprep.subr.mxu0 0.0
    %85 = vmatpush1.xpose.msra.mxu0 0.0
    %86 = vmatprep.subr.mxu0 0.0
    %87 = vmatpush1.xpose.msra.mxu0 0.0
    %88 = vmatprep.subr.mxu0 0.0
    %89 = vmatpush1.xpose.msra.mxu0 0.0
    %90 = vmatprep.subr.mxu0 0.0
    %91 = vmatpush1.xpose.msra.mxu0 0.0
    %92 = vmatprep.subr.mxu0 0.0
    %93 = vmatpush1.xpose.msra.mxu0 0.0
    %94 = vmatprep.subr.mxu0 0.0
    %95 = vmatpush1.xpose.msra.mxu0 0.0
    %96 = vmatprep.subr.mxu0 0.0
    %97 = vmatpush1.xpose.msra.mxu0 0.0
    %98 = vmatprep.subr.mxu0 0.0
    %99 = vmatpush1.xpose.msra.mxu0 0.0
    %100 = vmatprep.subr.mxu0 0.0
    %101 = vmatpush1.xpose.msra.mxu0 0.0
    %102 = vmatprep.subr.mxu0 0.0
    %103 = vmatpush1.xpose.msra.mxu0 0.0
    %104 = vmatprep.subr.mxu0 0.0
    %105 = vmatpush1.xpose.msra.mxu0 0.0
    %106 = vmatprep.subr.mxu0 0.0
    %107 = vmatpush1.xpose.msra.mxu0 0.0
    %108 = vmatprep.subr.mxu0 0.0
    %109 = vmatpush1.xpose.msra.mxu0 0.0
    %110 = vmatprep.subr.mxu0 0.0
    %111 = vmatpush1.xpose.msra.mxu0 0.0
    %112 = vmatprep.subr.mxu0 0.0
    %113 = vmatpush1.xpose.msra.mxu0 0.0
    %114 = vmatprep.subr.mxu0 0.0
    %115 = vmatpush1.xpose.msra.mxu0 0.0
    %116 = vmatprep.mubr.f32.mxu0 %v37
    %117 = vmatmul.mubr.f32.gmra.mrb[0].mxu0 %v36
    %v118 = vpop.f32.mrb[0].mxu0
    %v119 = vadd.f32 0.0, %v118
    %v120 = vpop.f32.mrb[0].mxu0
    %121 = vmatprep.mubr.f32.mxu0 %v45
    %122 = vmatmul.mubr.f32.gmra.mrb[0].mxu0 %v44
    %v123 = vpop.f32.mrb[0].mxu0
    %v124 = vadd.f32 0.0, %v123
    %v125 = vpop.f32.mrb[0].mxu0
    %126 = vdwg.mxu0
    %127 = vmatprep.subr.mxu0 %v39
    %128 = vmatpush1.xpose.msra.mxu0 %v38
    %129 = vmatprep.subr.mxu0 %v47
    %130 = vmatpush1.xpose.msra.mxu0 %v46
    %131 = vmatprep.subr.mxu0 0.0
    %132 = vmatpush1.xpose.msra.mxu0 0.0
    %133 = vmatprep.subr.mxu0 0.0
    %134 = vmatpush1.xpose.msra.mxu0 0.0
    %135 = vmatprep.subr.mxu0 0.0
    %136 = vmatpush1.xpose.msra.mxu0 0.0
    %137 = vmatprep.subr.mxu0 0.0
    %138 = vmatpush1.xpose.msra.mxu0 0.0
    %139 = vmatprep.subr.mxu0 0.0
    %140 = vmatpush1.xpose.msra.mxu0 0.0
    %141 = vmatprep.subr.mxu0 0.0
    %142 = vmatpush1.xpose.msra.mxu0 0.0
    %143 = vmatprep.subr.mxu0 0.0
    %144 = vmatpush1.xpose.msra.mxu0 0.0
    %145 = vmatprep.subr.mxu0 0.0
    %146 = vmatpush1.xpose.msra.mxu0 0.0
    %147 = vmatprep.subr.mxu0 0.0
    %148 = vmatpush1.xpose.msra.mxu0 0.0
    %149 = vmatprep.subr.mxu0 0.0
    %150 = vmatpush1.xpose.msra.mxu0 0.0
    %151 = vmatprep.subr.mxu0 0.0
    %152 = vmatpush1.xpose.msra.mxu0 0.0
    %153 = vmatprep.subr.mxu0 0.0
    %154 = vmatpush1.xpose.msra.mxu0 0.0
    %155 = vmatprep.subr.mxu0 0.0
    %156 = vmatpush1.xpose.msra.mxu0 0.0
    %157 = vmatprep.subr.mxu0 0.0
    %158 = vmatpush1.xpose.msra.mxu0 0.0
    %159 = vmatprep.subr.mxu0 0.0
    %160 = vmatpush1.xpose.msra.mxu0 0.0
    %161 = vmatprep.subr.mxu0 0.0
    %162 = vmatpush1.xpose.msra.mxu0 0.0
    %163 = vmatprep.subr.mxu0 0.0
    %164 = vmatpush1.xpose.msra.mxu0 0.0
    %165 = vmatprep.subr.mxu0 0.0
    %166 = vmatpush1.xpose.msra.mxu0 0.0
    %167 = vmatprep.subr.mxu0 0.0
    %168 = vmatpush1.xpose.msra.mxu0 0.0
    %169 = vmatprep.subr.mxu0 0.0
    %170 = vmatpush1.xpose.msra.mxu0 0.0
    %171 = vmatprep.subr.mxu0 0.0
    %172 = vmatpush1.xpose.msra.mxu0 0.0
    %173 = vmatprep.subr.mxu0 0.0
    %174 = vmatpush1.xpose.msra.mxu0 0.0
    %175 = vmatprep.subr.mxu0 0.0
    %176 = vmatpush1.xpose.msra.mxu0 0.0
    %177 = vmatprep.subr.mxu0 0.0
    %178 = vmatpush1.xpose.msra.mxu0 0.0
    %179 = vmatprep.subr.mxu0 0.0
    %180 = vmatpush1.xpose.msra.mxu0 0.0
    %181 = vmatprep.subr.mxu0 0.0
    %182 = vmatpush1.xpose.msra.mxu0 0.0
    %183 = vmatprep.subr.mxu0 0.0
    %184 = vmatpush1.xpose.msra.mxu0 0.0
    %185 = vmatprep.subr.mxu0 0.0
    %186 = vmatpush1.xpose.msra.mxu0 0.0
    %187 = vmatprep.subr.mxu0 0.0
    %188 = vmatpush1.xpose.msra.mxu0 0.0
    %189 = vmatprep.subr.mxu0 0.0
    %190 = vmatpush1.xpose.msra.mxu0 0.0
    %191 = vmatprep.mubr.f32.mxu0 %v39
    %192 = vmatmul.mubr.f32.gmra.mrb[0].mxu0 %v38
    %v193 = vpop.f32.mrb[0].mxu0
    %v194 = vadd.f32 %v119, %v193
    %v195 = vpop.f32.mrb[0].mxu0
    %196 = vmatprep.mubr.f32.mxu0 %v47
    %197 = vmatmul.mubr.f32.gmra.mrb[0].mxu0 %v46
    %v198 = vpop.f32.mrb[0].mxu0
    %v199 = vadd.f32 %v124, %v198
    %v200 = vpop.f32.mrb[0].mxu0
    %201 = vdwg.mxu0
    %202 = vmatprep.subr.mxu0 %v41
    %203 = vmatpush1.xpose.msra.mxu0 %v40
    %204 = vmatprep.subr.mxu0 %v49
    %205 = vmatpush1.xpose.msra.mxu0 %v48
    %206 = vmatprep.subr.mxu0 0.0
    %207 = vmatpush1.xpose.msra.mxu0 0.0
    %208 = vmatprep.subr.mxu0 0.0
    %209 = vmatpush1.xpose.msra.mxu0 0.0
    %210 = vmatprep.subr.mxu0 0.0
    %211 = vmatpush1.xpose.msra.mxu0 0.0
    %212 = vmatprep.subr.mxu0 0.0
    %213 = vmatpush1.xpose.msra.mxu0 0.0
    %214 = vmatprep.subr.mxu0 0.0
    %215 = vmatpush1.xpose.msra.mxu0 0.0
    %216 = vmatprep.subr.mxu0 0.0
    %217 = vmatpush1.xpose.msra.mxu0 0.0
    %218 = vmatprep.subr.mxu0 0.0
    %219 = vmatpush1.xpose.msra.mxu0 0.0
    %220 = vmatprep.subr.mxu0 0.0
    %221 = vmatpush1.xpose.msra.mxu0 0.0
    %222 = vmatprep.subr.mxu0 0.0
    %223 = vmatpush1.xpose.msra.mxu0 0.0
    %224 = vmatprep.subr.mxu0 0.0
    %225 = vmatpush1.xpose.msra.mxu0 0.0
    %226 = vmatprep.subr.mxu0 0.0
    %227 = vmatpush1.xpose.msra.mxu0 0.0
    %228 = vmatprep.subr.mxu0 0.0
    %229 = vmatpush1.xpose.msra.mxu0 0.0
    %230 = vmatprep.subr.mxu0 0.0
    %231 = vmatpush1.xpose.msra.mxu0 0.0
    %232 = vmatprep.subr.mxu0 0.0
    %233 = vmatpush1.xpose.msra.mxu0 0.0
    %234 = vmatprep.subr.mxu0 0.0
    %235 = vmatpush1.xpose.msra.mxu0 0.0
    %236 = vmatprep.subr.mxu0 0.0
    %237 = vmatpush1.xpose.msra.mxu0 0.0
    %238 = vmatprep.subr.mxu0 0.0
    %239 = vmatpush1.xpose.msra.mxu0 0.0
    %240 = vmatprep.subr.mxu0 0.0
    %241 = vmatpush1.xpose.msra.mxu0 0.0
    %242 = vmatprep.subr.mxu0 0.0
    %243 = vmatpush1.xpose.msra.mxu0 0.0
    %244 = vmatprep.subr.mxu0 0.0
    %245 = vmatpush1.xpose.msra.mxu0 0.0
    %246 = vmatprep.subr.mxu0 0.0
    %247 = vmatpush1.xpose.msra.mxu0 0.0
    %248 = vmatprep.subr.mxu0 0.0
    %249 = vmatpush1.xpose.msra.mxu0 0.0
    %250 = vmatprep.subr.mxu0 0.0
    %251 = vmatpush1.xpose.msra.mxu0 0.0
    %252 = vmatprep.subr.mxu0 0.0
    %253 = vmatpush1.xpose.msra.mxu0 0.0
    %254 = vmatprep.subr.mxu0 0.0
    %255 = vmatpush1.xpose.msra.mxu0 0.0
    %256 = vmatprep.subr.mxu0 0.0
    %257 = vmatpush1.xpose.msra.mxu0 0.0
    %258 = vmatprep.subr.mxu0 0.0
    %259 = vmatpush1.xpose.msra.mxu0 0.0
    %260 = vmatprep.subr.mxu0 0.0
    %261 = vmatpush1.xpose.msra.mxu0 0.0
    %262 = vmatprep.subr.mxu0 0.0
    %263 = vmatpush1.xpose.msra.mxu0 0.0
    %264 = vmatprep.subr.mxu0 0.0
    %265 = vmatpush1.xpose.msra.mxu0 0.0
    %266 = vmatprep.mubr.f32.mxu0 %v41
    %267 = vmatmul.mubr.f32.gmra.mrb[0].mxu0 %v40
    %v268 = vpop.f32.mrb[0].mxu0
    %v269 = vadd.f32 %v194, %v268
    %v270 = vpop.f32.mrb[0].mxu0
    %271 = vmatprep.mubr.f32.mxu0 %v49
    %272 = vmatmul.mubr.f32.gmra.mrb[0].mxu0 %v48
    %v273 = vpop.f32.mrb[0].mxu0
    %v274 = vadd.f32 %v199, %v273
    %v275 = vpop.f32.mrb[0].mxu0
    %276 = vdwg.mxu0
    %277 = vmatprep.subr.mxu0 %v43
    %278 = vmatpush1.xpose.msra.mxu0 %v42
    %279 = vmatprep.subr.mxu0 %v51
    %280 = vmatpush1.xpose.msra.mxu0 %v50
    %281 = vmatprep.subr.mxu0 0.0
    %282 = vmatpush1.xpose.msra.mxu0 0.0
    %283 = vmatprep.subr.mxu0 0.0
    %284 = vmatpush1.xpose.msra.mxu0 0.0
    %285 = vmatprep.subr.mxu0 0.0
    %286 = vmatpush1.xpose.msra.mxu0 0.0
    %287 = vmatprep.subr.mxu0 0.0
    %288 = vmatpush1.xpose.msra.mxu0 0.0
    %289 = vmatprep.subr.mxu0 0.0
    %290 = vmatpush1.xpose.msra.mxu0 0.0
    %291 = vmatprep.subr.mxu0 0.0
    %292 = vmatpush1.xpose.msra.mxu0 0.0
    %293 = vmatprep.subr.mxu0 0.0
    %294 = vmatpush1.xpose.msra.mxu0 0.0
    %295 = vmatprep.subr.mxu0 0.0
    %296 = vmatpush1.xpose.msra.mxu0 0.0
    %297 = vmatprep.subr.mxu0 0.0
    %298 = vmatpush1.xpose.msra.mxu0 0.0
    %299 = vmatprep.subr.mxu0 0.0
    %300 = vmatpush1.xpose.msra.mxu0 0.0
    %301 = vmatprep.subr.mxu0 0.0
    %302 = vmatpush1.xpose.msra.mxu0 0.0
    %303 = vmatprep.subr.mxu0 0.0
    %304 = vmatpush1.xpose.msra.mxu0 0.0
    %305 = vmatprep.subr.mxu0 0.0
    %306 = vmatpush1.xpose.msra.mxu0 0.0
    %307 = vmatprep.subr.mxu0 0.0
    %308 = vmatpush1.xpose.msra.mxu0 0.0
    %309 = vmatprep.subr.mxu0 0.0
    %310 = vmatpush1.xpose.msra.mxu0 0.0
    %311 = vmatprep.subr.mxu0 0.0
    %312 = vmatpush1.xpose.msra.mxu0 0.0
    %313 = vmatprep.subr.mxu0 0.0
    %314 = vmatpush1.xpose.msra.mxu0 0.0
    %315 = vmatprep.subr.mxu0 0.0
    %316 = vmatpush1.xpose.msra.mxu0 0.0
    %317 = vmatprep.subr.mxu0 0.0
    %318 = vmatpush1.xpose.msra.mxu0 0.0
    %319 = vmatprep.subr.mxu0 0.0
    %320 = vmatpush1.xpose.msra.mxu0 0.0
    %321 = vmatprep.subr.mxu0 0.0
    %322 = vmatpush1.xpose.msra.mxu0 0.0
    %323 = vmatprep.subr.mxu0 0.0
    %324 = vmatpush1.xpose.msra.mxu0 0.0
    %325 = vmatprep.subr.mxu0 0.0
    %326 = vmatpush1.xpose.msra.mxu0 0.0
    %327 = vmatprep.subr.mxu0 0.0
    %328 = vmatpush1.xpose.msra.mxu0 0.0
    %329 = vmatprep.subr.mxu0 0.0
    %330 = vmatpush1.xpose.msra.mxu0 0.0
    %331 = vmatprep.subr.mxu0 0.0
    %332 = vmatpush1.xpose.msra.mxu0 0.0
    %333 = vmatprep.subr.mxu0 0.0
    %334 = vmatpush1.xpose.msra.mxu0 0.0
    %335 = vmatprep.subr.mxu0 0.0
    %336 = vmatpush1.xpose.msra.mxu0 0.0
    %337 = vmatprep.subr.mxu0 0.0
    %338 = vmatpush1.xpose.msra.mxu0 0.0
    %339 = vmatprep.subr.mxu0 0.0
    %340 = vmatpush1.xpose.msra.mxu0 0.0
    %341 = vmatprep.mubr.f32.mxu0 %v43
    %342 = vmatmul.mubr.f32.gmra.mrb[0].mxu0 %v42
    %v343 = vpop.f32.mrb[0].mxu0
    %v344 = vadd.f32 %v269, %v343
    %v345 = vpop.f32.mrb[0].mxu0
    %346 = vmatprep.mubr.f32.mxu0 %v51
    %347 = vmatmul.mubr.f32.gmra.mrb[0].mxu0 %v50
    %v348 = vpop.f32.mrb[0].mxu0
    %v349 = vadd.f32 %v274, %v348
    %v350 = vpop.f32.mrb[0].mxu0
    %351 = vdwg.mxu0
    %v352 = vlaneseq
    %v353 = vshrl.u32 %v352, 7
    %v354 = vadd.s32 %v353, 8
    %v355 = vlaneseq
    %v356 = vand.u32 %v355, 127
    %vm357 = vcmp.eq.s32.totalorder %v353, %v356
    %vm358 = vcmp.eq.s32.totalorder %v354, %v356
    %v359 = vsel %vm357, %v344, 0.0
    %v360 = vsel %vm358, %v349, 0.0
    %vm361 = vcmask 130048
    %v362 = vsel %vm361, %v359, 0.0
    %363 = vadd.xlane.f32.xlu0 %v362
    %v364 = vpop.xlane.xlu0 %363
    %v365 = vsel %vm361, %v360, 0.0
    %366 = vadd.xlane.f32.xlu0 %v365
    %v367 = vpop.xlane.xlu0 %366
    %v368 = vadd.f32 %v362, %v365
    %v369 = vrot.slane %v368, 4
    %v370 = vadd.f32 %v368, %v369
    %v371 = vrot.slane %v370, 2
    %v372 = vadd.f32 %v370, %v371
    %v373 = vrot.slane %v372, 1
    %v374 = vadd.f32 %v372, %v373
    %v375 = vadd.f32 %v364, %v374
    %v376 = vadd.f32 %v367, %v374
    %v377 = vmul.f32 %v344, 2.0
    %v378 = vmul.f32 %v349, 2.0
    %v379 = vsub.f32 %v375, %v377
    %v380 = vsub.f32 %v376, %v378
    %v381 = vmax.f32 %v379, 1e-12
    %v382 = vmax.f32 %v380, 1e-12
    %v383 = vrsqrt.pop %v381
    %v384 = vmul.f32 %v381, %v383
    %vm385 = vcmp.eq.f32.partialorder %v381, inf
    %v386 = vsel %vm385, %v381, %v384
    %vm387 = vcmp.eq.f32.partialorder %v381, 0.0
    %v388 = vand.u32 %v381, 2147483648
    %v389 = vsel %vm387, %v388, %v386
    %v390 = vrsqrt.pop %v382
    %v391 = vmul.f32 %v382, %v390
    %vm392 = vcmp.eq.f32.partialorder %v382, inf
    %v393 = vsel %vm392, %v382, %v391
    %vm394 = vcmp.eq.f32.partialorder %v382, 0.0
    %v395 = vand.u32 %v382, 2147483648
    %v396 = vsel %vm394, %v395, %v393
    %v397 = vsel %vm357, 0.0, %v389
    %v398 = vsel %vm358, 0.0, %v396
    %v399 = vrcp.pop %v389
    %v400 = vmul.f32 1.0, %v399
    %v401 = vrcp.pop %v396
    %v402 = vmul.f32 1.0, %v401
    %v403 = vsel %vm357, 0.0, %v400
    %v404 = vsel %vm358, 0.0, %v402
    %vm405 = vcmask 64512
    %v406 = vsel %vm405, %v397, 0.0
    %407 = vadd.xlane.f32.xlu0 %v406
    %v408 = vpop.xlane.xlu0 %407
    %v409 = vrot.slane %v408, 4
    %v410 = vadd.f32 %v408, %v409
    %v411 = vrot.slane %v410, 2
    %v412 = vadd.f32 %v410, %v411
    %v413 = vrot.slane %v412, 1
    %v414 = vadd.f32 %v412, %v413
    %s415 = vtos %v414
    %v416 = vstv %s415
    %v417 = vrcp.pop %v416
    %s418 = vtos %v417
    %s419 = smul.f32 56.0, %s418
    %v420 = vstv %s419
    %v421 = vmul.f32 %v397, %v420
    %423 = vrot.lane.b32.xlu0 %v398, 120
    %v424 = vpop.permute.xlu0 %423
    %v426 = vsel %vm405, %v424, 0.0
    %427 = vadd.xlane.f32.xlu0 %v426
    %v428 = vpop.xlane.xlu0 %427
    %v429 = vrot.slane %v428, 4
    %v430 = vadd.f32 %v428, %v429
    %v431 = vrot.slane %v430, 2
    %v432 = vadd.f32 %v430, %v431
    %v433 = vrot.slane %v432, 1
    %v434 = vadd.f32 %v432, %v433
    %s435 = vtos %v434
    %v436 = vstv %s435
    %v437 = vrcp.pop %v436
    %s438 = vtos %v437
    %s439 = smul.f32 56.0, %s438
    %v440 = vstv %s439
    %v441 = vmul.f32 %v398, %v440
    %443 = vset.pattern.permute.xlu0 0
    %444 = vperm.xlu0 %443, %v344
    %v445 = vpop.permute.xlu0 %444
    %v447 = vsub.f32 %v344, %v445
    %v448 = vlaneseq
    %v449 = vshrl.u32 %v448, 7
    %v450 = vsub.s32 0, %v449
    %v451 = vrot.slane %v344, %v450
    %v452 = vsub.f32 %v447, %v451
    %s453 = vtos %v344
    %v454 = vstv %s453
    %v456 = vadd.f32 %v452, %v454
    %458 = vset.pattern.permute.xlu0 0
    %459 = vperm.xlu0 %458, %v403
    %v460 = vpop.permute.xlu0 %459
    %v462 = vlaneseq
    %v463 = vshrl.u32 %v462, 7
    %v464 = vsub.s32 0, %v463
    %v465 = vrot.slane %v403, %v464
    %v466 = vmul.f32 %v460, %v465
    %v467 = vmul.f32 %v456, %v466
    %469 = vset.pattern.permute.xlu0 8
    %470 = vperm.xlu0 %469, %v349
    %v471 = vpop.permute.xlu0 %470
    %v473 = vsub.f32 %v349, %v471
    %v474 = vlaneseq
    %v475 = vshrl.u32 %v474, 7
    %v476 = vsub.s32 0, %v475
    %v477 = vrot.slane %v349, %v476
    %v478 = vsub.f32 %v473, %v477
    %479 = vrot.lane.b32.xlu0 %v349, 120
    %v480 = vpop.permute.xlu0 %479
    %s481 = vtos %v480
    %v482 = vstv %s481
    %v484 = vadd.f32 %v478, %v482
    %486 = vset.pattern.permute.xlu0 8
    %487 = vperm.xlu0 %486, %v404
    %v488 = vpop.permute.xlu0 %487
    %v490 = vlaneseq
    %v491 = vshrl.u32 %v490, 7
    %v492 = vsub.s32 0, %v491
    %v493 = vrot.slane %v404, %v492
    %v494 = vmul.f32 %v488, %v493
    %v495 = vmul.f32 %v484, %v494
    %497 = vrot.lane.b32.xlu0 %v495, 120
    %v498 = vpop.permute.xlu0 %497
    %v500 = vsub.f32 %v467, %v498
    %v501 = vand.u32 2147483647, %v500
    %vm502 = vcmp.lt.f32.partialorder %v501, 1.0
    %v503 = vmul.f32 %v501, 0.5
    %v504 = vmul.f32 %v503, %v501
    %v505 = vsub.f32 %v501, 0.5
    %v506 = vsel %vm502, %v504, %v505
    %v507 = vadd.f32 %v506, 0.0
    %508 = vset.pattern.permute.xlu0 1
    %509 = vperm.xlu0 %508, %v344
    %v510 = vpop.permute.xlu0 %509
    %v512 = vsub.f32 %v344, %v510
    %v513 = vlaneseq
    %v514 = vshrl.u32 %v513, 7
    %v515 = vsub.s32 1, %v514
    %v516 = vrot.slane %v344, %v515
    %v517 = vsub.f32 %v512, %v516
    %v518 = vrot.slane %v344, 1
    %519 = vrot.lane.b32.xlu0 %v518, 127
    %v520 = vpop.permute.xlu0 %519
    %s521 = vtos %v520
    %v522 = vstv %s521
    %v524 = vadd.f32 %v517, %v522
    %525 = vset.pattern.permute.xlu0 1
    %526 = vperm.xlu0 %525, %v403
    %v527 = vpop.permute.xlu0 %526
    %v529 = vlaneseq
    %v530 = vshrl.u32 %v529, 7
    %v531 = vsub.s32 1, %v530
    %v532 = vrot.slane %v403, %v531
    %v533 = vmul.f32 %v527, %v532
    %v534 = vmul.f32 %v524, %v533
    %535 = vset.pattern.permute.xlu0 9
    %536 = vperm.xlu0 %535, %v349
    %v537 = vpop.permute.xlu0 %536
    %v539 = vsub.f32 %v349, %v537
    %v540 = vlaneseq
    %v541 = vshrl.u32 %v540, 7
    %v542 = vsub.s32 1, %v541
    %v543 = vrot.slane %v349, %v542
    %v544 = vsub.f32 %v539, %v543
    %v545 = vrot.slane %v349, 1
    %546 = vrot.lane.b32.xlu0 %v545, 119
    %v547 = vpop.permute.xlu0 %546
    %s548 = vtos %v547
    %v549 = vstv %s548
    %v551 = vadd.f32 %v544, %v549
    %552 = vset.pattern.permute.xlu0 9
    %553 = vperm.xlu0 %552, %v404
    %v554 = vpop.permute.xlu0 %553
    %v556 = vlaneseq
    %v557 = vshrl.u32 %v556, 7
    %v558 = vsub.s32 1, %v557
    %v559 = vrot.slane %v404, %v558
    %v560 = vmul.f32 %v554, %v559
    %v561 = vmul.f32 %v551, %v560
    %563 = vrot.lane.b32.xlu0 %v561, 120
    %v564 = vpop.permute.xlu0 %563
    %v566 = vsub.f32 %v534, %v564
    %v567 = vand.u32 2147483647, %v566
    %vm568 = vcmp.lt.f32.partialorder %v567, 1.0
    %v569 = vmul.f32 %v567, 0.5
    %v570 = vmul.f32 %v569, %v567
    %v571 = vsub.f32 %v567, 0.5
    %v572 = vsel %vm568, %v570, %v571
    %v573 = vadd.f32 %v507, %v572
    %574 = vset.pattern.permute.xlu0 2
    %575 = vperm.xlu0 %574, %v344
    %v576 = vpop.permute.xlu0 %575
    %v578 = vsub.f32 %v344, %v576
    %v579 = vlaneseq
    %v580 = vshrl.u32 %v579, 7
    %v581 = vsub.s32 2, %v580
    %v582 = vrot.slane %v344, %v581
    %v583 = vsub.f32 %v578, %v582
    %v584 = vrot.slane %v344, 2
    %585 = vrot.lane.b32.xlu0 %v584, 126
    %v586 = vpop.permute.xlu0 %585
    %s587 = vtos %v586
    %v588 = vstv %s587
    %v590 = vadd.f32 %v583, %v588
    %591 = vset.pattern.permute.xlu0 2
    %592 = vperm.xlu0 %591, %v403
    %v593 = vpop.permute.xlu0 %592
    %v595 = vlaneseq
    %v596 = vshrl.u32 %v595, 7
    %v597 = vsub.s32 2, %v596
    %v598 = vrot.slane %v403, %v597
    %v599 = vmul.f32 %v593, %v598
    %v600 = vmul.f32 %v590, %v599
    %601 = vset.pattern.permute.xlu0 10
    %602 = vperm.xlu0 %601, %v349
    %v603 = vpop.permute.xlu0 %602
    %v605 = vsub.f32 %v349, %v603
    %v606 = vlaneseq
    %v607 = vshrl.u32 %v606, 7
    %v608 = vsub.s32 2, %v607
    %v609 = vrot.slane %v349, %v608
    %v610 = vsub.f32 %v605, %v609
    %v611 = vrot.slane %v349, 2
    %612 = vrot.lane.b32.xlu0 %v611, 118
    %v613 = vpop.permute.xlu0 %612
    %s614 = vtos %v613
    %v615 = vstv %s614
    %v617 = vadd.f32 %v610, %v615
    %618 = vset.pattern.permute.xlu0 10
    %619 = vperm.xlu0 %618, %v404
    %v620 = vpop.permute.xlu0 %619
    %v622 = vlaneseq
    %v623 = vshrl.u32 %v622, 7
    %v624 = vsub.s32 2, %v623
    %v625 = vrot.slane %v404, %v624
    %v626 = vmul.f32 %v620, %v625
    %v627 = vmul.f32 %v617, %v626
    %629 = vrot.lane.b32.xlu0 %v627, 120
    %v630 = vpop.permute.xlu0 %629
    %v632 = vsub.f32 %v600, %v630
    %v633 = vand.u32 2147483647, %v632
    %vm634 = vcmp.lt.f32.partialorder %v633, 1.0
    %v635 = vmul.f32 %v633, 0.5
    %v636 = vmul.f32 %v635, %v633
    %v637 = vsub.f32 %v633, 0.5
    %v638 = vsel %vm634, %v636, %v637
    %v639 = vadd.f32 %v573, %v638
    %640 = vset.pattern.permute.xlu0 3
    %641 = vperm.xlu0 %640, %v344
    %v642 = vpop.permute.xlu0 %641
    %v644 = vsub.f32 %v344, %v642
    %v645 = vlaneseq
    %v646 = vshrl.u32 %v645, 7
    %v647 = vsub.s32 3, %v646
    %v648 = vrot.slane %v344, %v647
    %v649 = vsub.f32 %v644, %v648
    %v650 = vrot.slane %v344, 3
    %651 = vrot.lane.b32.xlu0 %v650, 125
    %v652 = vpop.permute.xlu0 %651
    %s653 = vtos %v652
    %v654 = vstv %s653
    %v656 = vadd.f32 %v649, %v654
    %657 = vset.pattern.permute.xlu0 3
    %658 = vperm.xlu0 %657, %v403
    %v659 = vpop.permute.xlu0 %658
    %v661 = vlaneseq
    %v662 = vshrl.u32 %v661, 7
    %v663 = vsub.s32 3, %v662
    %v664 = vrot.slane %v403, %v663
    %v665 = vmul.f32 %v659, %v664
    %v666 = vmul.f32 %v656, %v665
    %667 = vset.pattern.permute.xlu0 11
    %668 = vperm.xlu0 %667, %v349
    %v669 = vpop.permute.xlu0 %668
    %v671 = vsub.f32 %v349, %v669
    %v672 = vlaneseq
    %v673 = vshrl.u32 %v672, 7
    %v674 = vsub.s32 3, %v673
    %v675 = vrot.slane %v349, %v674
    %v676 = vsub.f32 %v671, %v675
    %v677 = vrot.slane %v349, 3
    %678 = vrot.lane.b32.xlu0 %v677, 117
    %v679 = vpop.permute.xlu0 %678
    %s680 = vtos %v679
    %v681 = vstv %s680
    %v683 = vadd.f32 %v676, %v681
    %684 = vset.pattern.permute.xlu0 11
    %685 = vperm.xlu0 %684, %v404
    %v686 = vpop.permute.xlu0 %685
    %v688 = vlaneseq
    %v689 = vshrl.u32 %v688, 7
    %v690 = vsub.s32 3, %v689
    %v691 = vrot.slane %v404, %v690
    %v692 = vmul.f32 %v686, %v691
    %v693 = vmul.f32 %v683, %v692
    %695 = vrot.lane.b32.xlu0 %v693, 120
    %v696 = vpop.permute.xlu0 %695
    %v698 = vsub.f32 %v666, %v696
    %v699 = vand.u32 2147483647, %v698
    %vm700 = vcmp.lt.f32.partialorder %v699, 1.0
    %v701 = vmul.f32 %v699, 0.5
    %v702 = vmul.f32 %v701, %v699
    %v703 = vsub.f32 %v699, 0.5
    %v704 = vsel %vm700, %v702, %v703
    %v705 = vadd.f32 %v639, %v704
    %706 = vset.pattern.permute.xlu0 4
    %707 = vperm.xlu0 %706, %v344
    %v708 = vpop.permute.xlu0 %707
    %v710 = vsub.f32 %v344, %v708
    %v711 = vlaneseq
    %v712 = vshrl.u32 %v711, 7
    %v713 = vsub.s32 4, %v712
    %v714 = vrot.slane %v344, %v713
    %v715 = vsub.f32 %v710, %v714
    %v716 = vrot.slane %v344, 4
    %717 = vrot.lane.b32.xlu0 %v716, 124
    %v718 = vpop.permute.xlu0 %717
    %s719 = vtos %v718
    %v720 = vstv %s719
    %v722 = vadd.f32 %v715, %v720
    %723 = vset.pattern.permute.xlu0 4
    %724 = vperm.xlu0 %723, %v403
    %v725 = vpop.permute.xlu0 %724
    %v727 = vlaneseq
    %v728 = vshrl.u32 %v727, 7
    %v729 = vsub.s32 4, %v728
    %v730 = vrot.slane %v403, %v729
    %v731 = vmul.f32 %v725, %v730
    %v732 = vmul.f32 %v722, %v731
    %733 = vset.pattern.permute.xlu0 12
    %734 = vperm.xlu0 %733, %v349
    %v735 = vpop.permute.xlu0 %734
    %v737 = vsub.f32 %v349, %v735
    %v738 = vlaneseq
    %v739 = vshrl.u32 %v738, 7
    %v740 = vsub.s32 4, %v739
    %v741 = vrot.slane %v349, %v740
    %v742 = vsub.f32 %v737, %v741
    %v743 = vrot.slane %v349, 4
    %744 = vrot.lane.b32.xlu0 %v743, 116
    %v745 = vpop.permute.xlu0 %744
    %s746 = vtos %v745
    %v747 = vstv %s746
    %v749 = vadd.f32 %v742, %v747
    %750 = vset.pattern.permute.xlu0 12
    %751 = vperm.xlu0 %750, %v404
    %v752 = vpop.permute.xlu0 %751
    %v754 = vlaneseq
    %v755 = vshrl.u32 %v754, 7
    %v756 = vsub.s32 4, %v755
    %v757 = vrot.slane %v404, %v756
    %v758 = vmul.f32 %v752, %v757
    %v759 = vmul.f32 %v749, %v758
    %761 = vrot.lane.b32.xlu0 %v759, 120
    %v762 = vpop.permute.xlu0 %761
    %v764 = vsub.f32 %v732, %v762
    %v765 = vand.u32 2147483647, %v764
    %vm766 = vcmp.lt.f32.partialorder %v765, 1.0
    %v767 = vmul.f32 %v765, 0.5
    %v768 = vmul.f32 %v767, %v765
    %v769 = vsub.f32 %v765, 0.5
    %v770 = vsel %vm766, %v768, %v769
    %v771 = vadd.f32 %v705, %v770
    %772 = vset.pattern.permute.xlu0 5
    %773 = vperm.xlu0 %772, %v344
    %v774 = vpop.permute.xlu0 %773
    %v776 = vsub.f32 %v344, %v774
    %v777 = vlaneseq
    %v778 = vshrl.u32 %v777, 7
    %v779 = vsub.s32 5, %v778
    %v780 = vrot.slane %v344, %v779
    %v781 = vsub.f32 %v776, %v780
    %v782 = vrot.slane %v344, 5
    %783 = vrot.lane.b32.xlu0 %v782, 123
    %v784 = vpop.permute.xlu0 %783
    %s785 = vtos %v784
    %v786 = vstv %s785
    %v788 = vadd.f32 %v781, %v786
    %789 = vset.pattern.permute.xlu0 5
    %790 = vperm.xlu0 %789, %v403
    %v791 = vpop.permute.xlu0 %790
    %v793 = vlaneseq
    %v794 = vshrl.u32 %v793, 7
    %v795 = vsub.s32 5, %v794
    %v796 = vrot.slane %v403, %v795
    %v797 = vmul.f32 %v791, %v796
    %v798 = vmul.f32 %v788, %v797
    %799 = vset.pattern.permute.xlu0 13
    %800 = vperm.xlu0 %799, %v349
    %v801 = vpop.permute.xlu0 %800
    %v803 = vsub.f32 %v349, %v801
    %v804 = vlaneseq
    %v805 = vshrl.u32 %v804, 7
    %v806 = vsub.s32 5, %v805
    %v807 = vrot.slane %v349, %v806
    %v808 = vsub.f32 %v803, %v807
    %v809 = vrot.slane %v349, 5
    %810 = vrot.lane.b32.xlu0 %v809, 115
    %v811 = vpop.permute.xlu0 %810
    %s812 = vtos %v811
    %v813 = vstv %s812
    %v815 = vadd.f32 %v808, %v813
    %816 = vset.pattern.permute.xlu0 13
    %817 = vperm.xlu0 %816, %v404
    %v818 = vpop.permute.xlu0 %817
    %v820 = vlaneseq
    %v821 = vshrl.u32 %v820, 7
    %v822 = vsub.s32 5, %v821
    %v823 = vrot.slane %v404, %v822
    %v824 = vmul.f32 %v818, %v823
    %v825 = vmul.f32 %v815, %v824
    %827 = vrot.lane.b32.xlu0 %v825, 120
    %v828 = vpop.permute.xlu0 %827
    %v830 = vsub.f32 %v798, %v828
    %v831 = vand.u32 2147483647, %v830
    %vm832 = vcmp.lt.f32.partialorder %v831, 1.0
    %v833 = vmul.f32 %v831, 0.5
    %v834 = vmul.f32 %v833, %v831
    %v835 = vsub.f32 %v831, 0.5
    %v836 = vsel %vm832, %v834, %v835
    %v837 = vadd.f32 %v771, %v836
    %838 = vset.pattern.permute.xlu0 6
    %839 = vperm.xlu0 %838, %v344
    %v840 = vpop.permute.xlu0 %839
    %v842 = vsub.f32 %v344, %v840
    %v843 = vlaneseq
    %v844 = vshrl.u32 %v843, 7
    %v845 = vsub.s32 6, %v844
    %v846 = vrot.slane %v344, %v845
    %v847 = vsub.f32 %v842, %v846
    %v848 = vrot.slane %v344, 6
    %849 = vrot.lane.b32.xlu0 %v848, 122
    %v850 = vpop.permute.xlu0 %849
    %s851 = vtos %v850
    %v852 = vstv %s851
    %v854 = vadd.f32 %v847, %v852
    %855 = vset.pattern.permute.xlu0 6
    %856 = vperm.xlu0 %855, %v403
    %v857 = vpop.permute.xlu0 %856
    %v859 = vlaneseq
    %v860 = vshrl.u32 %v859, 7
    %v861 = vsub.s32 6, %v860
    %v862 = vrot.slane %v403, %v861
    %v863 = vmul.f32 %v857, %v862
    %v864 = vmul.f32 %v854, %v863
    %865 = vset.pattern.permute.xlu0 14
    %866 = vperm.xlu0 %865, %v349
    %v867 = vpop.permute.xlu0 %866
    %v869 = vsub.f32 %v349, %v867
    %v870 = vlaneseq
    %v871 = vshrl.u32 %v870, 7
    %v872 = vsub.s32 6, %v871
    %v873 = vrot.slane %v349, %v872
    %v874 = vsub.f32 %v869, %v873
    %v875 = vrot.slane %v349, 6
    %876 = vrot.lane.b32.xlu0 %v875, 114
    %v877 = vpop.permute.xlu0 %876
    %s878 = vtos %v877
    %v879 = vstv %s878
    %v881 = vadd.f32 %v874, %v879
    %882 = vset.pattern.permute.xlu0 14
    %883 = vperm.xlu0 %882, %v404
    %v884 = vpop.permute.xlu0 %883
    %v886 = vlaneseq
    %v887 = vshrl.u32 %v886, 7
    %v888 = vsub.s32 6, %v887
    %v889 = vrot.slane %v404, %v888
    %v890 = vmul.f32 %v884, %v889
    %v891 = vmul.f32 %v881, %v890
    %893 = vrot.lane.b32.xlu0 %v891, 120
    %v894 = vpop.permute.xlu0 %893
    %v896 = vsub.f32 %v864, %v894
    %v897 = vand.u32 2147483647, %v896
    %vm898 = vcmp.lt.f32.partialorder %v897, 1.0
    %v899 = vmul.f32 %v897, 0.5
    %v900 = vmul.f32 %v899, %v897
    %v901 = vsub.f32 %v897, 0.5
    %v902 = vsel %vm898, %v900, %v901
    %v903 = vadd.f32 %v837, %v902
    %904 = vset.pattern.permute.xlu0 7
    %905 = vperm.xlu0 %904, %v344
    %v906 = vpop.permute.xlu0 %905
    %v908 = vsub.f32 %v344, %v906
    %v909 = vlaneseq
    %v910 = vshrl.u32 %v909, 7
    %v911 = vsub.s32 7, %v910
    %v912 = vrot.slane %v344, %v911
    %v913 = vsub.f32 %v908, %v912
    %v914 = vrot.slane %v344, 7
    %915 = vrot.lane.b32.xlu0 %v914, 121
    %v916 = vpop.permute.xlu0 %915
    %s917 = vtos %v916
    %v918 = vstv %s917
    %v920 = vadd.f32 %v913, %v918
    %921 = vset.pattern.permute.xlu0 7
    %922 = vperm.xlu0 %921, %v403
    %v923 = vpop.permute.xlu0 %922
    %v925 = vlaneseq
    %v926 = vshrl.u32 %v925, 7
    %v927 = vsub.s32 7, %v926
    %v928 = vrot.slane %v403, %v927
    %v929 = vmul.f32 %v923, %v928
    %v930 = vmul.f32 %v920, %v929
    %931 = vset.pattern.permute.xlu0 15
    %932 = vperm.xlu0 %931, %v349
    %v933 = vpop.permute.xlu0 %932
    %v935 = vsub.f32 %v349, %v933
    %v936 = vlaneseq
    %v937 = vshrl.u32 %v936, 7
    %v938 = vsub.s32 7, %v937
    %v939 = vrot.slane %v349, %v938
    %v940 = vsub.f32 %v935, %v939
    %v941 = vrot.slane %v349, 7
    %942 = vrot.lane.b32.xlu0 %v941, 113
    %v943 = vpop.permute.xlu0 %942
    %s944 = vtos %v943
    %v945 = vstv %s944
    %v947 = vadd.f32 %v940, %v945
    %948 = vset.pattern.permute.xlu0 15
    %949 = vperm.xlu0 %948, %v404
    %v950 = vpop.permute.xlu0 %949
    %v952 = vlaneseq
    %v953 = vshrl.u32 %v952, 7
    %v954 = vsub.s32 7, %v953
    %v955 = vrot.slane %v404, %v954
    %v956 = vmul.f32 %v950, %v955
    %v957 = vmul.f32 %v947, %v956
    %959 = vrot.lane.b32.xlu0 %v957, 120
    %v960 = vpop.permute.xlu0 %959
    %v962 = vsub.f32 %v930, %v960
    %v963 = vand.u32 2147483647, %v962
    %vm964 = vcmp.lt.f32.partialorder %v963, 1.0
    %v965 = vmul.f32 %v963, 0.5
    %v966 = vmul.f32 %v965, %v963
    %v967 = vsub.f32 %v963, 0.5
    %v968 = vsel %vm964, %v966, %v967
    %v969 = vadd.f32 %v903, %v968
    %971 = vrot.lane.b32.xlu0 %v441, 120
    %v972 = vpop.permute.xlu0 %971
    %v974 = vsub.f32 %v421, %v972
    %v975 = vand.u32 2147483647, %v974
    %vm976 = vcmp.lt.f32.partialorder %v975, 1.0
    %v977 = vmul.f32 %v975, 0.5
    %v978 = vmul.f32 %v977, %v975
    %v979 = vsub.f32 %v975, 0.5
    %v980 = vsel %vm976, %v978, %v979
    %v981 = vmul.f32 %v980, 0.03125
    %v982 = vmul.f32 %v969, 0.005859375
    %v983 = vadd.f32 %v981, %v982
    %v984 = vsel %vm405, %v983, 0.0
    %985 = vadd.xlane.f32.xlu0 %v984
    %v986 = vpop.xlane.xlu0 %985
    %v987 = vrot.slane %v986, 4
    %v988 = vadd.f32 %v986, %v987
    %v989 = vrot.slane %v988, 2
    %v990 = vadd.f32 %v988, %v989
    %v991 = vrot.slane %v990, 1
    %v992 = vadd.f32 %v990, %v991
    %s993 = vtos %v992
    %s994 = scalar_lea.smem [#allocation7], 0
    %995 = sst [smem:[%s994]] %s993
    // Predicated region
    $region18: #{tpu_custom_call.1} parent=1 // pred_check
      _
    $region19: #{tpu_custom_call.1} parent=1 // pred_check_branch
      %997 = sbr.rel (0) target = $region21
    $region20: #{tpu_custom_call.1} parent=1 // pred_region
      %s999 = ssub.s32 16, 16
      %1000 = vsyncadd [#allocation4], %s999
      %1003 = dma.smem_to_hbm [#allocation7], 16, %s2, [#allocation4]
    $region21: #{tpu_custom_call.1} parent=1 // pred_fallthru
      _
    // Predicated region
    $region22: #{tpu_custom_call.1} parent=1 // pred_check
      _
    $region23: #{tpu_custom_call.1} parent=1 // pred_check_branch
      %1005 = sbr.rel (0) target = $region25
    $region24: #{tpu_custom_call.1} parent=1 // pred_region
      %1006 = dma.done [#allocation4], 16
    $region25: #{tpu_custom_call.1} parent=1 // pred_fallthru
      _
    %1007 = sfence
    %1008 = vsyncpa [#allocation3], 1
    %1009 = vsyncpa [#allocation6], 1
    %1010 = vsyncpa [#allocation4], 1

</llo_original>
